<compile_context>
chip_gen: v6e
topology: v6e:2x2x1
jax: 0.10.0
libtpu: 0.0.40
codegen_flags: <defaults>
</compile_context>

<pallas_src>
import jax
import jax.numpy as jnp
from jax import lax
from jax.experimental import pallas as pl
from jax.experimental.pallas import tpu as pltpu


def bilstm_kernel(xflat_ref, wih_f_ref, wih_b_ref, bias_ref, whh2_ref, wfc_ref, bfc_ref,
                  out_ref, projf_ref, projb_ref):
    """Hoisted per-direction input projections (VMEM-staged) + fused bidirectional LSTM
    recurrence + FC + sigmoid."""
    TB = xflat_ref.shape[0]            # T * Bp
    Bp = out_ref.shape[0]              # padded batch (multiple of 8)
    T = TB // Bp
    fourH = whh2_ref.shape[0]          # 4*H  == width of duplicated state [h_f|h_b | h_f|h_b]
    H = fourH // 4
    eightH = 2 * fourH                 # fused gate width: [I | F | G | O], each 2H (= [fwd|bwd])

    # ---- hoisted input projections: two one-shot MXU matmuls, staged in VMEM scratch ----
    # fwd gate columns live in wih_f_ref, bwd gate columns in wih_b_ref; fused bias folded into
    # the fwd projection so the per-step combine is just two slice-adds.
    x = xflat_ref[...]                                                        # [T*Bp, E]
    projf_ref[...] = jnp.dot(x, wih_f_ref[...],
                             preferred_element_type=jnp.float32) + bias_ref[...]   # [T*Bp, 8H]
    projb_ref[...] = jnp.dot(x, wih_b_ref[...],
                             preferred_element_type=jnp.float32)                    # [T*Bp, 8H]

    # Lane masks, created once and reused by every unrolled step (no per-step broadcasts).
    lane8 = lax.broadcasted_iota(jnp.int32, (Bp, eightH), 1)
    tanh_mask = (lane8 >= 4 * H) & (lane8 < 6 * H)     # the G block gets tanh, rest sigmoid
    lane4 = lax.broadcasted_iota(jnp.int32, (Bp, fourH), 1)
    lo_mask = lane4 < 2 * H                            # first half of a [ .. | .. ] lane pair

    # Duplicated state: hdup = [h_f|h_b | h_f|h_b], cdup = [c_f|c_b | c_f|c_b]  -> full 128 lanes.
    hdup = jnp.zeros((Bp, fourH), jnp.float32)
    cdup = jnp.zeros((Bp, fourH), jnp.float32)

    # Static (fully unrolled) time loop.  Per step: ONE small matmul on the serial chain (whh2 is
    # re-read from VMEM, not held as a live value) plus ONE full-tile tanh.  The forward direction
    # reads the step-t projection slice, the backward direction the step-(T-1-t) slice, so no
    # [x_t | x_{T-1-t}] concat is ever materialized.
    for t in range(T):
        rt = T - 1 - t
        gates = (projf_ref[t * Bp:(t + 1) * Bp, :]
                 + projb_ref[rt * Bp:(rt + 1) * Bp, :]
                 + jnp.dot(hdup, whh2_ref[...], preferred_element_type=jnp.float32))  # [Bp, 8H]
        # Single transcendental per element: sigmoid(g) = 0.5 * tanh(0.5 * g) + 0.5.
        pre = jnp.where(tanh_mask, gates, 0.5 * gates)
        th = jnp.tanh(pre)
        act = jnp.where(tanh_mask, th, 0.5 * th + 0.5)
        if_part = act[:, :fourH]       # [I | F]  (vreg-aligned 128-lane slice)
        go_part = act[:, fourH:]       # [G | O]
        # [I*G | F*c]  via a lane-mask select (no sub-vreg slicing)
        prod = if_part * jnp.where(lo_mask, go_part, cdup)
        # c' duplicated into both halves: [c' | c']
        cdup = prod + pltpu.roll(prod, shift=2 * H, axis=1)
        # [O | O]
        odup = jnp.where(lo_mask, pltpu.roll(go_part, shift=2 * H, axis=1), go_part)
        # h' duplicated: [h' | h']
        hdup = odup * jnp.tanh(cdup)

    # Final FC (2H -> 1) + sigmoid as a VPU multiply + lane reduction (no concat, no N=1 MXU dot).
    # wfc_ref = [w_fc^T | zeros] so the duplicated half of hdup contributes nothing.
    # Output stays [Bp, 1]; at Bp=8 a lane-dense [1, Bp] layout buys nothing (revisit at scale).
    logits = jnp.sum(hdup * wfc_ref[...], axis=1, keepdims=True) + bfc_ref[...]   # [Bp, 1]
    out_ref[...] = jax.nn.sigmoid(logits)


def fuse_bilstm_params(params):
    """Build fused, gate-major weights once in the wrapper.

    Gate-major column layout (width 8H): [I_f|I_b | F_f|F_b | G_f|G_b | O_f|O_b].
    """
    H = params["whh_f"].shape[0]
    E = params["wih_f"].shape[0]
    f32 = jnp.float32

    def place_dir(w, rows, offset):
        # Scatter PyTorch-ordered (i, f, g, o) gate blocks of one direction (offset 0 = fwd,
        # 1 = bwd) into the fused [rows, 8H] gate-major layout.
        out = jnp.zeros((rows, 8 * H), f32)
        for k in range(4):
            c0 = k * 2 * H + offset * H
            out = out.at[:, c0:c0 + H].set(w[:, k * H:(k + 1) * H])
        return out

    wih_f8 = place_dir(params["wih_f"].astype(f32), E, 0)                  # [E, 8H] fwd columns
    wih_b8 = place_dir(params["wih_b"].astype(f32), E, 1)                  # [E, 8H] bwd columns
    whh_fused = jnp.concatenate(
        [place_dir(params["whh_f"].astype(f32), H, 0),
         place_dir(params["whh_b"].astype(f32), H, 1)], axis=0)            # [2H, 8H]
    # Recurrence weight extended to K = 4H so the duplicated [h|h] state multiplies cleanly
    # (second copy hits zero rows).  At H >= 64 drop this zero K-extension and contract
    # hdup[:, :2H] directly (clean vreg boundary); at H = 32 that slice would be a masked
    # sub-128-lane read, so keep the extension.
    whh2 = jnp.concatenate([whh_fused, jnp.zeros_like(whh_fused)], axis=0)  # [4H, 8H]

    parts = []
    for k in range(4):
        parts.append(params["b_f"][:, k * H:(k + 1) * H])
        parts.append(params["b_b"][:, k * H:(k + 1) * H])
    bias_fused = jnp.concatenate(parts, axis=1).astype(f32)                # [1, 8H]

    wfc_pad = jnp.concatenate(
        [params["w_fc"].T.astype(f32), jnp.zeros((1, 2 * H), f32)], axis=1)  # [1, 4H]
    return wih_f8, wih_b8, bias_fused, whh2, wfc_pad, params["b_fc"].astype(f32)


def bilstm_forward(tokens, params):
    B, T = tokens.shape
    E = params["embedding"].shape[1]
    H = params["whh_f"].shape[0]
    # Layout assumptions behind the fused-lane tricks -- fail loudly, not via hidden relayouts.
    assert H % 32 == 0, "state_dim must be a multiple of 32 (2H/4H on 128-lane vreg boundaries)"
    Bp = ((B + 7) // 8) * 8                                    # pad batch to a sublane multiple
    assert Bp % 8 == 0

    # Cheap wrapper glue on the tiny int32 token array only (transpose + pad), then a single
    # embedding gather straight into time-major [T, Bp, E].  No float concat / reversal / big
    # transpose of embedded activations.
    # TODO(synk): gather embedding rows in-kernel (scalar-prefetched tokens + DMA gather) to drop
    # the remaining HBM round trip at production sizes.
    tok_t = jnp.pad(tokens.T, ((0, 0), (0, Bp - B)))                          # [T, Bp]
    x = jnp.take(params["embedding"], tok_t, axis=0).astype(jnp.float32)      # [T, Bp, E]
    xflat = x.reshape(T * Bp, E)

    wih_f8, wih_b8, bias_fused, whh2, wfc_pad, b_fc = fuse_bilstm_params(params)

    vmem = pl.BlockSpec(memory_space=pltpu.MemorySpace.VMEM)
    out = pl.pallas_call(
        bilstm_kernel,
        out_shape=jax.ShapeDtypeStruct((Bp, 1), jnp.float32),
        in_specs=[vmem] * 7,
        out_specs=vmem,
        scratch_shapes=[pltpu.VMEM((T * Bp, 8 * H), jnp.float32),   # staged fwd projection
                        pltpu.VMEM((T * Bp, 8 * H), jnp.float32)],  # staged bwd projection
    )(xflat, wih_f8, wih_b8, bias_fused, whh2, wfc_pad, b_fc)
    return out[:B]


def init_params(key, vocab_size, embedding_dim, state_dim):
    k = 1.0 / jnp.sqrt(jnp.float32(state_dim))
    keys = jax.random.split(key, 10)
    u = lambda kk, shape: jax.random.uniform(kk, shape, jnp.float32, -k, k)
    return {
        "embedding": jax.random.normal(keys[0], (vocab_size, embedding_dim), jnp.float32),
        # forward direction (PyTorch weight_ih_l0 / weight_hh_l0, transposed; b = b_ih + b_hh)
        "wih_f": u(keys[1], (embedding_dim, 4 * state_dim)),
        "whh_f": u(keys[2], (state_dim, 4 * state_dim)),
        "b_f": u(keys[3], (1, 4 * state_dim)) + u(keys[4], (1, 4 * state_dim)),
        # backward direction (weight_ih_l0_reverse / weight_hh_l0_reverse)
        "wih_b": u(keys[5], (embedding_dim, 4 * state_dim)),
        "whh_b": u(keys[6], (state_dim, 4 * state_dim)),
        "b_b": u(keys[7], (1, 4 * state_dim)) + u(keys[8], (1, 4 * state_dim)),
        # fc: Linear(2*state_dim, 1)
        "w_fc": u(keys[9], (2 * state_dim, 1)),
        "b_fc": jnp.zeros((1, 1), jnp.float32),
    }


def bilstm_reference(tokens, params):
    """Pure-JAX reference mirroring torch semantics, for correctness check."""
    x = jnp.take(params["embedding"], tokens, axis=0).astype(jnp.float32)  # [B,T,E]
    B, T, _ = x.shape
    H = params["whh_f"].shape[0]

    def cell(x_t, h, c, wih, whh, b):
        g = x_t @ wih + h @ whh + b
        i = jax.nn.sigmoid(g[:, :H])
        f = jax.nn.sigmoid(g[:, H:2 * H])
        gg = jnp.tanh(g[:, 2 * H:3 * H])
        o = jax.nn.sigmoid(g[:, 3 * H:])
        c = f * c + i * gg
        return o * jnp.tanh(c), c

    h_f = c_f = h_b = c_b = jnp.zeros((B, H), jnp.float32)
    for t in range(T):
        h_f, c_f = cell(x[:, t], h_f, c_f, params["wih_f"], params["whh_f"], params["b_f"])
        h_b, c_b = cell(x[:, T - 1 - t], h_b, c_b, params["wih_b"], params["whh_b"], params["b_b"])
    concat = jnp.concatenate([h_f, h_b], axis=1)
    return jax.nn.sigmoid(concat @ params["w_fc"] + params["b_fc"])


if __name__ == "__main__":
    vocab_size, embedding_dim, state_dim = 50, 16, 32
    batch, seq_len = 2, 8

    key = jax.random.PRNGKey(0)
    k_params, k_tokens = jax.random.split(key)
    params = init_params(k_params, vocab_size, embedding_dim, state_dim)
    tokens = jax.random.randint(k_tokens, (batch, seq_len), 0, vocab_size, jnp.int32)

    fwd = jax.jit(bilstm_forward)
    out = jax.block_until_ready(fwd(tokens, params))
    ref = jax.block_until_ready(bilstm_reference(tokens, params))

    assert out.shape == (batch, 1), out.shape
    assert jnp.allclose(out, ref, atol=1e-5, rtol=1e-5), (out, ref)
    print("KERNEL_OK")
</pallas_src>

<mosaic_0001>
module attributes {stable_mosaic.version = 11 : i64} {
  func.func @bilstm_kernel(%arg0: memref<64x16xf32, #tpu.memory_space<vmem>>, %arg1: memref<16x256xf32, #tpu.memory_space<vmem>>, %arg2: memref<16x256xf32, #tpu.memory_space<vmem>>, %arg3: memref<1x256xf32, #tpu.memory_space<vmem>>, %arg4: memref<128x256xf32, #tpu.memory_space<vmem>>, %arg5: memref<1x128xf32, #tpu.memory_space<vmem>>, %arg6: memref<1x1xf32, #tpu.memory_space<vmem>>, %arg7: memref<8x1xf32, #tpu.memory_space<vmem>>, %arg8: memref<64x256xf32, #tpu.memory_space<vmem>>, %arg9: memref<64x256xf32, #tpu.memory_space<vmem>>) attributes {dimension_semantics = [], scalar_prefetch = 0 : i64, scratch_operands = 2 : i64, tpu.core_type = #tpu.core_type<tc>} {
    %c0 = arith.constant 0 : index
    %c0_0 = arith.constant 0 : index
    %0 = vector.load %arg0[%c0, %c0_0] : memref<64x16xf32, #tpu.memory_space<vmem>>, vector<64x16xf32>
    %c0_1 = arith.constant 0 : index
    %c0_2 = arith.constant 0 : index
    %1 = vector.load %arg1[%c0_1, %c0_2] : memref<16x256xf32, #tpu.memory_space<vmem>>, vector<16x256xf32>
    %cst = arith.constant dense<0.000000e+00> : vector<64x256xf32>
    %2 = tpu.matmul %0, %1, %cst {dimension_numbers = #tpu.dot_dimension_numbers<[1], [0], [0], [1], [0, 0, 1, 1], [], []>} : vector<64x16xf32>, vector<16x256xf32>, vector<64x256xf32> -> vector<64x256xf32>
    %c0_3 = arith.constant 0 : index
    %c0_4 = arith.constant 0 : index
    %3 = vector.load %arg3[%c0_3, %c0_4] : memref<1x256xf32, #tpu.memory_space<vmem>>, vector<1x256xf32>
    %4 = vector.broadcast %3 : vector<1x256xf32> to vector<64x256xf32>
    %5 = arith.addf %2, %4 : vector<64x256xf32>
    %c0_5 = arith.constant 0 : index
    %c0_6 = arith.constant 0 : index
    %6 = vector.load %arg8[%c0_5, %c0_6] : memref<64x256xf32, #tpu.memory_space<vmem>>, vector<64x256xf32>
    tpu.vector_store %arg8[%c0_5, %c0_6], %5 {strides = array<i32>} : memref<64x256xf32, #tpu.memory_space<vmem>>, vector<64x256xf32>,
    %c0_7 = arith.constant 0 : index
    %c0_8 = arith.constant 0 : index
    %7 = vector.load %arg2[%c0_7, %c0_8] : memref<16x256xf32, #tpu.memory_space<vmem>>, vector<16x256xf32>
    %cst_9 = arith.constant dense<0.000000e+00> : vector<64x256xf32>
    %8 = tpu.matmul %0, %7, %cst_9 {dimension_numbers = #tpu.dot_dimension_numbers<[1], [0], [0], [1], [0, 0, 1, 1], [], []>} : vector<64x16xf32>, vector<16x256xf32>, vector<64x256xf32> -> vector<64x256xf32>
    %c0_10 = arith.constant 0 : index
    %c0_11 = arith.constant 0 : index
    %9 = vector.load %arg9[%c0_10, %c0_11] : memref<64x256xf32, #tpu.memory_space<vmem>>, vector<64x256xf32>
    tpu.vector_store %arg9[%c0_10, %c0_11], %8 {strides = array<i32>} : memref<64x256xf32, #tpu.memory_space<vmem>>, vector<64x256xf32>,
    %10 = tpu.iota {dimensions = array<i32: 1>} : vector<8x256xi32>
    %c128_i32 = arith.constant 128 : i32
    %11 = vector.broadcast %c128_i32 : i32 to vector<8x256xi32>
    %12 = arith.cmpi sge, %10, %11 : vector<8x256xi32>
    %c192_i32 = arith.constant 192 : i32
    %13 = vector.broadcast %c192_i32 : i32 to vector<8x256xi32>
    %14 = arith.cmpi slt, %10, %13 : vector<8x256xi32>
    %15 = arith.andi %12, %14 : vector<8x256xi1>
    %16 = tpu.iota {dimensions = array<i32: 1>} : vector<8x128xi32>
    %c64_i32 = arith.constant 64 : i32
    %17 = vector.broadcast %c64_i32 : i32 to vector<8x128xi32>
    %18 = arith.cmpi slt, %16, %17 : vector<8x128xi32>
    %cst_12 = arith.constant 0.000000e+00 : f32
    %19 = vector.broadcast %cst_12 : f32 to vector<8x128xf32>
    %cst_13 = arith.constant 0.000000e+00 : f32
    %20 = vector.broadcast %cst_13 : f32 to vector<8x128xf32>
    %c0_14 = arith.constant 0 : index
    %c0_15 = arith.constant 0 : index
    %21 = vector.load %arg8[%c0_14, %c0_15] : memref<64x256xf32, #tpu.memory_space<vmem>>, vector<8x256xf32>
    %c56 = arith.constant 56 : index
    %c0_16 = arith.constant 0 : index
    %22 = vector.load %arg9[%c56, %c0_16] : memref<64x256xf32, #tpu.memory_space<vmem>>, vector<8x256xf32>
    %23 = arith.addf %21, %22 : vector<8x256xf32>
    %c0_17 = arith.constant 0 : index
    %c0_18 = arith.constant 0 : index
    %24 = vector.load %arg4[%c0_17, %c0_18] : memref<128x256xf32, #tpu.memory_space<vmem>>, vector<128x256xf32>
    %cst_19 = arith.constant dense<0.000000e+00> : vector<8x256xf32>
    %25 = tpu.matmul %19, %24, %cst_19 {dimension_numbers = #tpu.dot_dimension_numbers<[1], [0], [0], [1], [0, 0, 1, 1], [], []>} : vector<8x128xf32>, vector<128x256xf32>, vector<8x256xf32> -> vector<8x256xf32>
    %26 = arith.addf %23, %25 : vector<8x256xf32>
    %cst_20 = arith.constant 5.000000e-01 : f32
    %27 = vector.broadcast %cst_20 : f32 to vector<8x256xf32>
    %28 = arith.mulf %27, %26 : vector<8x256xf32>
    %29 = arith.select %15, %26, %28 : vector<8x256xi1>, vector<8x256xf32>
    %30 = math.tanh %29 : vector<8x256xf32>
    %cst_21 = arith.constant 5.000000e-01 : f32
    %31 = vector.broadcast %cst_21 : f32 to vector<8x256xf32>
    %32 = arith.mulf %31, %30 : vector<8x256xf32>
    %cst_22 = arith.constant 5.000000e-01 : f32
    %33 = vector.broadcast %cst_22 : f32 to vector<8x256xf32>
    %34 = arith.addf %32, %33 : vector<8x256xf32>
    %35 = arith.select %15, %30, %34 : vector<8x256xi1>, vector<8x256xf32>
    %36 = vector.extract_strided_slice %35 {offsets = [0, 0], sizes = [8, 128], strides = [1, 1]} : vector<8x256xf32> to vector<8x128xf32>
    %37 = vector.extract_strided_slice %35 {offsets = [0, 128], sizes = [8, 128], strides = [1, 1]} : vector<8x256xf32> to vector<8x128xf32>
    %38 = arith.select %18, %37, %20 : vector<8x128xi1>, vector<8x128xf32>
    %39 = arith.mulf %36, %38 : vector<8x128xf32>
    %c64_i32_23 = arith.constant 64 : i32
    %40 = tpu.dynamic_rotate %39 by %c64_i32_23 dim 1 : vector<8x128xf32>, i32 -> vector<8x128xf32>
    %41 = arith.addf %39, %40 : vector<8x128xf32>
    %c64_i32_24 = arith.constant 64 : i32
    %42 = tpu.dynamic_rotate %37 by %c64_i32_24 dim 1 : vector<8x128xf32>, i32 -> vector<8x128xf32>
    %43 = arith.select %18, %42, %37 : vector<8x128xi1>, vector<8x128xf32>
    %44 = math.tanh %41 : vector<8x128xf32>
    %45 = arith.mulf %43, %44 : vector<8x128xf32>
    %c8 = arith.constant 8 : index
    %c0_25 = arith.constant 0 : index
    %46 = vector.load %arg8[%c8, %c0_25] : memref<64x256xf32, #tpu.memory_space<vmem>>, vector<8x256xf32>
    %c48 = arith.constant 48 : index
    %c0_26 = arith.constant 0 : index
    %47 = vector.load %arg9[%c48, %c0_26] : memref<64x256xf32, #tpu.memory_space<vmem>>, vector<8x256xf32>
    %48 = arith.addf %46, %47 : vector<8x256xf32>
    %c0_27 = arith.constant 0 : index
    %c0_28 = arith.constant 0 : index
    %49 = vector.load %arg4[%c0_27, %c0_28] : memref<128x256xf32, #tpu.memory_space<vmem>>, vector<128x256xf32>
    %cst_29 = arith.constant dense<0.000000e+00> : vector<8x256xf32>
    %50 = tpu.matmul %45, %49, %cst_29 {dimension_numbers = #tpu.dot_dimension_numbers<[1], [0], [0], [1], [0, 0, 1, 1], [], []>} : vector<8x128xf32>, vector<128x256xf32>, vector<8x256xf32> -> vector<8x256xf32>
    %51 = arith.addf %48, %50 : vector<8x256xf32>
    %cst_30 = arith.constant 5.000000e-01 : f32
    %52 = vector.broadcast %cst_30 : f32 to vector<8x256xf32>
    %53 = arith.mulf %52, %51 : vector<8x256xf32>
    %54 = arith.select %15, %51, %53 : vector<8x256xi1>, vector<8x256xf32>
    %55 = math.tanh %54 : vector<8x256xf32>
    %cst_31 = arith.constant 5.000000e-01 : f32
    %56 = vector.broadcast %cst_31 : f32 to vector<8x256xf32>
    %57 = arith.mulf %56, %55 : vector<8x256xf32>
    %cst_32 = arith.constant 5.000000e-01 : f32
    %58 = vector.broadcast %cst_32 : f32 to vector<8x256xf32>
    %59 = arith.addf %57, %58 : vector<8x256xf32>
    %60 = arith.select %15, %55, %59 : vector<8x256xi1>, vector<8x256xf32>
    %61 = vector.extract_strided_slice %60 {offsets = [0, 0], sizes = [8, 128], strides = [1, 1]} : vector<8x256xf32> to vector<8x128xf32>
    %62 = vector.extract_strided_slice %60 {offsets = [0, 128], sizes = [8, 128], strides = [1, 1]} : vector<8x256xf32> to vector<8x128xf32>
    %63 = arith.select %18, %62, %41 : vector<8x128xi1>, vector<8x128xf32>
    %64 = arith.mulf %61, %63 : vector<8x128xf32>
    %c64_i32_33 = arith.constant 64 : i32
    %65 = tpu.dynamic_rotate %64 by %c64_i32_33 dim 1 : vector<8x128xf32>, i32 -> vector<8x128xf32>
    %66 = arith.addf %64, %65 : vector<8x128xf32>
    %c64_i32_34 = arith.constant 64 : i32
    %67 = tpu.dynamic_rotate %62 by %c64_i32_34 dim 1 : vector<8x128xf32>, i32 -> vector<8x128xf32>
    %68 = arith.select %18, %67, %62 : vector<8x128xi1>, vector<8x128xf32>
    %69 = math.tanh %66 : vector<8x128xf32>
    %70 = arith.mulf %68, %69 : vector<8x128xf32>
    %c16 = arith.constant 16 : index
    %c0_35 = arith.constant 0 : index
    %71 = vector.load %arg8[%c16, %c0_35] : memref<64x256xf32, #tpu.memory_space<vmem>>, vector<8x256xf32>
    %c40 = arith.constant 40 : index
    %c0_36 = arith.constant 0 : index
    %72 = vector.load %arg9[%c40, %c0_36] : memref<64x256xf32, #tpu.memory_space<vmem>>, vector<8x256xf32>
    %73 = arith.addf %71, %72 : vector<8x256xf32>
    %c0_37 = arith.constant 0 : index
    %c0_38 = arith.constant 0 : index
    %74 = vector.load %arg4[%c0_37, %c0_38] : memref<128x256xf32, #tpu.memory_space<vmem>>, vector<128x256xf32>
    %cst_39 = arith.constant dense<0.000000e+00> : vector<8x256xf32>
    %75 = tpu.matmul %70, %74, %cst_39 {dimension_numbers = #tpu.dot_dimension_numbers<[1], [0], [0], [1], [0, 0, 1, 1], [], []>} : vector<8x128xf32>, vector<128x256xf32>, vector<8x256xf32> -> vector<8x256xf32>
    %76 = arith.addf %73, %75 : vector<8x256xf32>
    %cst_40 = arith.constant 5.000000e-01 : f32
    %77 = vector.broadcast %cst_40 : f32 to vector<8x256xf32>
    %78 = arith.mulf %77, %76 : vector<8x256xf32>
    %79 = arith.select %15, %76, %78 : vector<8x256xi1>, vector<8x256xf32>
    %80 = math.tanh %79 : vector<8x256xf32>
    %cst_41 = arith.constant 5.000000e-01 : f32
    %81 = vector.broadcast %cst_41 : f32 to vector<8x256xf32>
    %82 = arith.mulf %81, %80 : vector<8x256xf32>
    %cst_42 = arith.constant 5.000000e-01 : f32
    %83 = vector.broadcast %cst_42 : f32 to vector<8x256xf32>
    %84 = arith.addf %82, %83 : vector<8x256xf32>
    %85 = arith.select %15, %80, %84 : vector<8x256xi1>, vector<8x256xf32>
    %86 = vector.extract_strided_slice %85 {offsets = [0, 0], sizes = [8, 128], strides = [1, 1]} : vector<8x256xf32> to vector<8x128xf32>
    %87 = vector.extract_strided_slice %85 {offsets = [0, 128], sizes = [8, 128], strides = [1, 1]} : vector<8x256xf32> to vector<8x128xf32>
    %88 = arith.select %18, %87, %66 : vector<8x128xi1>, vector<8x128xf32>
    %89 = arith.mulf %86, %88 : vector<8x128xf32>
    %c64_i32_43 = arith.constant 64 : i32
    %90 = tpu.dynamic_rotate %89 by %c64_i32_43 dim 1 : vector<8x128xf32>, i32 -> vector<8x128xf32>
    %91 = arith.addf %89, %90 : vector<8x128xf32>
    %c64_i32_44 = arith.constant 64 : i32
    %92 = tpu.dynamic_rotate %87 by %c64_i32_44 dim 1 : vector<8x128xf32>, i32 -> vector<8x128xf32>
    %93 = arith.select %18, %92, %87 : vector<8x128xi1>, vector<8x128xf32>
    %94 = math.tanh %91 : vector<8x128xf32>
    %95 = arith.mulf %93, %94 : vector<8x128xf32>
    %c24 = arith.constant 24 : index
    %c0_45 = arith.constant 0 : index
    %96 = vector.load %arg8[%c24, %c0_45] : memref<64x256xf32, #tpu.memory_space<vmem>>, vector<8x256xf32>
    %c32 = arith.constant 32 : index
    %c0_46 = arith.constant 0 : index
    %97 = vector.load %arg9[%c32, %c0_46] : memref<64x256xf32, #tpu.memory_space<vmem>>, vector<8x256xf32>
    %98 = arith.addf %96, %97 : vector<8x256xf32>
    %c0_47 = arith.constant 0 : index
    %c0_48 = arith.constant 0 : index
    %99 = vector.load %arg4[%c0_47, %c0_48] : memref<128x256xf32, #tpu.memory_space<vmem>>, vector<128x256xf32>
    %cst_49 = arith.constant dense<0.000000e+00> : vector<8x256xf32>
    %100 = tpu.matmul %95, %99, %cst_49 {dimension_numbers = #tpu.dot_dimension_numbers<[1], [0], [0], [1], [0, 0, 1, 1], [], []>} : vector<8x128xf32>, vector<128x256xf32>, vector<8x256xf32> -> vector<8x256xf32>
    %101 = arith.addf %98, %100 : vector<8x256xf32>
    %cst_50 = arith.constant 5.000000e-01 : f32
    %102 = vector.broadcast %cst_50 : f32 to vector<8x256xf32>
    %103 = arith.mulf %102, %101 : vector<8x256xf32>
    %104 = arith.select %15, %101, %103 : vector<8x256xi1>, vector<8x256xf32>
    %105 = math.tanh %104 : vector<8x256xf32>
    %cst_51 = arith.constant 5.000000e-01 : f32
    %106 = vector.broadcast %cst_51 : f32 to vector<8x256xf32>
    %107 = arith.mulf %106, %105 : vector<8x256xf32>
    %cst_52 = arith.constant 5.000000e-01 : f32
    %108 = vector.broadcast %cst_52 : f32 to vector<8x256xf32>
    %109 = arith.addf %107, %108 : vector<8x256xf32>
    %110 = arith.select %15, %105, %109 : vector<8x256xi1>, vector<8x256xf32>
    %111 = vector.extract_strided_slice %110 {offsets = [0, 0], sizes = [8, 128], strides = [1, 1]} : vector<8x256xf32> to vector<8x128xf32>
    %112 = vector.extract_strided_slice %110 {offsets = [0, 128], sizes = [8, 128], strides = [1, 1]} : vector<8x256xf32> to vector<8x128xf32>
    %113 = arith.select %18, %112, %91 : vector<8x128xi1>, vector<8x128xf32>
    %114 = arith.mulf %111, %113 : vector<8x128xf32>
    %c64_i32_53 = arith.constant 64 : i32
    %115 = tpu.dynamic_rotate %114 by %c64_i32_53 dim 1 : vector<8x128xf32>, i32 -> vector<8x128xf32>
    %116 = arith.addf %114, %115 : vector<8x128xf32>
    %c64_i32_54 = arith.constant 64 : i32
    %117 = tpu.dynamic_rotate %112 by %c64_i32_54 dim 1 : vector<8x128xf32>, i32 -> vector<8x128xf32>
    %118 = arith.select %18, %117, %112 : vector<8x128xi1>, vector<8x128xf32>
    %119 = math.tanh %116 : vector<8x128xf32>
    %120 = arith.mulf %118, %119 : vector<8x128xf32>
    %c32_55 = arith.constant 32 : index
    %c0_56 = arith.constant 0 : index
    %121 = vector.load %arg8[%c32_55, %c0_56] : memref<64x256xf32, #tpu.memory_space<vmem>>, vector<8x256xf32>
    %c24_57 = arith.constant 24 : index
    %c0_58 = arith.constant 0 : index
    %122 = vector.load %arg9[%c24_57, %c0_58] : memref<64x256xf32, #tpu.memory_space<vmem>>, vector<8x256xf32>
    %123 = arith.addf %121, %122 : vector<8x256xf32>
    %c0_59 = arith.constant 0 : index
    %c0_60 = arith.constant 0 : index
    %124 = vector.load %arg4[%c0_59, %c0_60] : memref<128x256xf32, #tpu.memory_space<vmem>>, vector<128x256xf32>
    %cst_61 = arith.constant dense<0.000000e+00> : vector<8x256xf32>
    %125 = tpu.matmul %120, %124, %cst_61 {dimension_numbers = #tpu.dot_dimension_numbers<[1], [0], [0], [1], [0, 0, 1, 1], [], []>} : vector<8x128xf32>, vector<128x256xf32>, vector<8x256xf32> -> vector<8x256xf32>
    %126 = arith.addf %123, %125 : vector<8x256xf32>
    %cst_62 = arith.constant 5.000000e-01 : f32
    %127 = vector.broadcast %cst_62 : f32 to vector<8x256xf32>
    %128 = arith.mulf %127, %126 : vector<8x256xf32>
    %129 = arith.select %15, %126, %128 : vector<8x256xi1>, vector<8x256xf32>
    %130 = math.tanh %129 : vector<8x256xf32>
    %cst_63 = arith.constant 5.000000e-01 : f32
    %131 = vector.broadcast %cst_63 : f32 to vector<8x256xf32>
    %132 = arith.mulf %131, %130 : vector<8x256xf32>
    %cst_64 = arith.constant 5.000000e-01 : f32
    %133 = vector.broadcast %cst_64 : f32 to vector<8x256xf32>
    %134 = arith.addf %132, %133 : vector<8x256xf32>
    %135 = arith.select %15, %130, %134 : vector<8x256xi1>, vector<8x256xf32>
    %136 = vector.extract_strided_slice %135 {offsets = [0, 0], sizes = [8, 128], strides = [1, 1]} : vector<8x256xf32> to vector<8x128xf32>
    %137 = vector.extract_strided_slice %135 {offsets = [0, 128], sizes = [8, 128], strides = [1, 1]} : vector<8x256xf32> to vector<8x128xf32>
    %138 = arith.select %18, %137, %116 : vector<8x128xi1>, vector<8x128xf32>
    %139 = arith.mulf %136, %138 : vector<8x128xf32>
    %c64_i32_65 = arith.constant 64 : i32
    %140 = tpu.dynamic_rotate %139 by %c64_i32_65 dim 1 : vector<8x128xf32>, i32 -> vector<8x128xf32>
    %141 = arith.addf %139, %140 : vector<8x128xf32>
    %c64_i32_66 = arith.constant 64 : i32
    %142 = tpu.dynamic_rotate %137 by %c64_i32_66 dim 1 : vector<8x128xf32>, i32 -> vector<8x128xf32>
    %143 = arith.select %18, %142, %137 : vector<8x128xi1>, vector<8x128xf32>
    %144 = math.tanh %141 : vector<8x128xf32>
    %145 = arith.mulf %143, %144 : vector<8x128xf32>
    %c40_67 = arith.constant 40 : index
    %c0_68 = arith.constant 0 : index
    %146 = vector.load %arg8[%c40_67, %c0_68] : memref<64x256xf32, #tpu.memory_space<vmem>>, vector<8x256xf32>
    %c16_69 = arith.constant 16 : index
    %c0_70 = arith.constant 0 : index
    %147 = vector.load %arg9[%c16_69, %c0_70] : memref<64x256xf32, #tpu.memory_space<vmem>>, vector<8x256xf32>
    %148 = arith.addf %146, %147 : vector<8x256xf32>
    %c0_71 = arith.constant 0 : index
    %c0_72 = arith.constant 0 : index
    %149 = vector.load %arg4[%c0_71, %c0_72] : memref<128x256xf32, #tpu.memory_space<vmem>>, vector<128x256xf32>
    %cst_73 = arith.constant dense<0.000000e+00> : vector<8x256xf32>
    %150 = tpu.matmul %145, %149, %cst_73 {dimension_numbers = #tpu.dot_dimension_numbers<[1], [0], [0], [1], [0, 0, 1, 1], [], []>} : vector<8x128xf32>, vector<128x256xf32>, vector<8x256xf32> -> vector<8x256xf32>
    %151 = arith.addf %148, %150 : vector<8x256xf32>
    %cst_74 = arith.constant 5.000000e-01 : f32
    %152 = vector.broadcast %cst_74 : f32 to vector<8x256xf32>
    %153 = arith.mulf %152, %151 : vector<8x256xf32>
    %154 = arith.select %15, %151, %153 : vector<8x256xi1>, vector<8x256xf32>
    %155 = math.tanh %154 : vector<8x256xf32>
    %cst_75 = arith.constant 5.000000e-01 : f32
    %156 = vector.broadcast %cst_75 : f32 to vector<8x256xf32>
    %157 = arith.mulf %156, %155 : vector<8x256xf32>
    %cst_76 = arith.constant 5.000000e-01 : f32
    %158 = vector.broadcast %cst_76 : f32 to vector<8x256xf32>
    %159 = arith.addf %157, %158 : vector<8x256xf32>
    %160 = arith.select %15, %155, %159 : vector<8x256xi1>, vector<8x256xf32>
    %161 = vector.extract_strided_slice %160 {offsets = [0, 0], sizes = [8, 128], strides = [1, 1]} : vector<8x256xf32> to vector<8x128xf32>
    %162 = vector.extract_strided_slice %160 {offsets = [0, 128], sizes = [8, 128], strides = [1, 1]} : vector<8x256xf32> to vector<8x128xf32>
    %163 = arith.select %18, %162, %141 : vector<8x128xi1>, vector<8x128xf32>
    %164 = arith.mulf %161, %163 : vector<8x128xf32>
    %c64_i32_77 = arith.constant 64 : i32
    %165 = tpu.dynamic_rotate %164 by %c64_i32_77 dim 1 : vector<8x128xf32>, i32 -> vector<8x128xf32>
    %166 = arith.addf %164, %165 : vector<8x128xf32>
    %c64_i32_78 = arith.constant 64 : i32
    %167 = tpu.dynamic_rotate %162 by %c64_i32_78 dim 1 : vector<8x128xf32>, i32 -> vector<8x128xf32>
    %168 = arith.select %18, %167, %162 : vector<8x128xi1>, vector<8x128xf32>
    %169 = math.tanh %166 : vector<8x128xf32>
    %170 = arith.mulf %168, %169 : vector<8x128xf32>
    %c48_79 = arith.constant 48 : index
    %c0_80 = arith.constant 0 : index
    %171 = vector.load %arg8[%c48_79, %c0_80] : memref<64x256xf32, #tpu.memory_space<vmem>>, vector<8x256xf32>
    %c8_81 = arith.constant 8 : index
    %c0_82 = arith.constant 0 : index
    %172 = vector.load %arg9[%c8_81, %c0_82] : memref<64x256xf32, #tpu.memory_space<vmem>>, vector<8x256xf32>
    %173 = arith.addf %171, %172 : vector<8x256xf32>
    %c0_83 = arith.constant 0 : index
    %c0_84 = arith.constant 0 : index
    %174 = vector.load %arg4[%c0_83, %c0_84] : memref<128x256xf32, #tpu.memory_space<vmem>>, vector<128x256xf32>
    %cst_85 = arith.constant dense<0.000000e+00> : vector<8x256xf32>
    %175 = tpu.matmul %170, %174, %cst_85 {dimension_numbers = #tpu.dot_dimension_numbers<[1], [0], [0], [1], [0, 0, 1, 1], [], []>} : vector<8x128xf32>, vector<128x256xf32>, vector<8x256xf32> -> vector<8x256xf32>
    %176 = arith.addf %173, %175 : vector<8x256xf32>
    %cst_86 = arith.constant 5.000000e-01 : f32
    %177 = vector.broadcast %cst_86 : f32 to vector<8x256xf32>
    %178 = arith.mulf %177, %176 : vector<8x256xf32>
    %179 = arith.select %15, %176, %178 : vector<8x256xi1>, vector<8x256xf32>
    %180 = math.tanh %179 : vector<8x256xf32>
    %cst_87 = arith.constant 5.000000e-01 : f32
    %181 = vector.broadcast %cst_87 : f32 to vector<8x256xf32>
    %182 = arith.mulf %181, %180 : vector<8x256xf32>
    %cst_88 = arith.constant 5.000000e-01 : f32
    %183 = vector.broadcast %cst_88 : f32 to vector<8x256xf32>
    %184 = arith.addf %182, %183 : vector<8x256xf32>
    %185 = arith.select %15, %180, %184 : vector<8x256xi1>, vector<8x256xf32>
    %186 = vector.extract_strided_slice %185 {offsets = [0, 0], sizes = [8, 128], strides = [1, 1]} : vector<8x256xf32> to vector<8x128xf32>
    %187 = vector.extract_strided_slice %185 {offsets = [0, 128], sizes = [8, 128], strides = [1, 1]} : vector<8x256xf32> to vector<8x128xf32>
    %188 = arith.select %18, %187, %166 : vector<8x128xi1>, vector<8x128xf32>
    %189 = arith.mulf %186, %188 : vector<8x128xf32>
    %c64_i32_89 = arith.constant 64 : i32
    %190 = tpu.dynamic_rotate %189 by %c64_i32_89 dim 1 : vector<8x128xf32>, i32 -> vector<8x128xf32>
    %191 = arith.addf %189, %190 : vector<8x128xf32>
    %c64_i32_90 = arith.constant 64 : i32
    %192 = tpu.dynamic_rotate %187 by %c64_i32_90 dim 1 : vector<8x128xf32>, i32 -> vector<8x128xf32>
    %193 = arith.select %18, %192, %187 : vector<8x128xi1>, vector<8x128xf32>
    %194 = math.tanh %191 : vector<8x128xf32>
    %195 = arith.mulf %193, %194 : vector<8x128xf32>
    %c56_91 = arith.constant 56 : index
    %c0_92 = arith.constant 0 : index
    %196 = vector.load %arg8[%c56_91, %c0_92] : memref<64x256xf32, #tpu.memory_space<vmem>>, vector<8x256xf32>
    %c0_93 = arith.constant 0 : index
    %c0_94 = arith.constant 0 : index
    %197 = vector.load %arg9[%c0_93, %c0_94] : memref<64x256xf32, #tpu.memory_space<vmem>>, vector<8x256xf32>
    %198 = arith.addf %196, %197 : vector<8x256xf32>
    %c0_95 = arith.constant 0 : index
    %c0_96 = arith.constant 0 : index
    %199 = vector.load %arg4[%c0_95, %c0_96] : memref<128x256xf32, #tpu.memory_space<vmem>>, vector<128x256xf32>
    %cst_97 = arith.constant dense<0.000000e+00> : vector<8x256xf32>
    %200 = tpu.matmul %195, %199, %cst_97 {dimension_numbers = #tpu.dot_dimension_numbers<[1], [0], [0], [1], [0, 0, 1, 1], [], []>} : vector<8x128xf32>, vector<128x256xf32>, vector<8x256xf32> -> vector<8x256xf32>
    %201 = arith.addf %198, %200 : vector<8x256xf32>
    %cst_98 = arith.constant 5.000000e-01 : f32
    %202 = vector.broadcast %cst_98 : f32 to vector<8x256xf32>
    %203 = arith.mulf %202, %201 : vector<8x256xf32>
    %204 = arith.select %15, %201, %203 : vector<8x256xi1>, vector<8x256xf32>
    %205 = math.tanh %204 : vector<8x256xf32>
    %cst_99 = arith.constant 5.000000e-01 : f32
    %206 = vector.broadcast %cst_99 : f32 to vector<8x256xf32>
    %207 = arith.mulf %206, %205 : vector<8x256xf32>
    %cst_100 = arith.constant 5.000000e-01 : f32
    %208 = vector.broadcast %cst_100 : f32 to vector<8x256xf32>
    %209 = arith.addf %207, %208 : vector<8x256xf32>
    %210 = arith.select %15, %205, %209 : vector<8x256xi1>, vector<8x256xf32>
    %211 = vector.extract_strided_slice %210 {offsets = [0, 0], sizes = [8, 128], strides = [1, 1]} : vector<8x256xf32> to vector<8x128xf32>
    %212 = vector.extract_strided_slice %210 {offsets = [0, 128], sizes = [8, 128], strides = [1, 1]} : vector<8x256xf32> to vector<8x128xf32>
    %213 = arith.select %18, %212, %191 : vector<8x128xi1>, vector<8x128xf32>
    %214 = arith.mulf %211, %213 : vector<8x128xf32>
    %c64_i32_101 = arith.constant 64 : i32
    %215 = tpu.dynamic_rotate %214 by %c64_i32_101 dim 1 : vector<8x128xf32>, i32 -> vector<8x128xf32>
    %216 = arith.addf %214, %215 : vector<8x128xf32>
    %c64_i32_102 = arith.constant 64 : i32
    %217 = tpu.dynamic_rotate %212 by %c64_i32_102 dim 1 : vector<8x128xf32>, i32 -> vector<8x128xf32>
    %218 = arith.select %18, %217, %212 : vector<8x128xi1>, vector<8x128xf32>
    %219 = math.tanh %216 : vector<8x128xf32>
    %220 = arith.mulf %218, %219 : vector<8x128xf32>
    %c0_103 = arith.constant 0 : index
    %c0_104 = arith.constant 0 : index
    %221 = vector.load %arg5[%c0_103, %c0_104] : memref<1x128xf32, #tpu.memory_space<vmem>>, vector<1x128xf32>
    %222 = vector.broadcast %221 : vector<1x128xf32> to vector<8x128xf32>
    %223 = arith.mulf %220, %222 : vector<8x128xf32>
    %cst_105 = arith.constant dense<0.000000e+00> : vector<8xf32>
    %224 = vector.multi_reduction <add>, %223, %cst_105 [1] : vector<8x128xf32> to vector<8xf32>
    %225 = vector.shape_cast %224 : vector<8xf32> to vector<8x1xf32>
    %c0_106 = arith.constant 0 : index
    %c0_107 = arith.constant 0 : index
    %226 = vector.load %arg6[%c0_106, %c0_107] : memref<1x1xf32, #tpu.memory_space<vmem>>, vector<1x1xf32>
    %227 = vector.broadcast %226 : vector<1x1xf32> to vector<8x1xf32>
    %228 = arith.addf %225, %227 : vector<8x1xf32>
    %229 = arith.negf %228 : vector<8x1xf32>
    %230 = math.exp %229 : vector<8x1xf32>
    %cst_108 = arith.constant 1.000000e+00 : f32
    %231 = vector.broadcast %cst_108 : f32 to vector<8x1xf32>
    %232 = arith.addf %231, %230 : vector<8x1xf32>
    %233 = arith.divf %231, %232 : vector<8x1xf32>
    %c0_109 = arith.constant 0 : index
    %c0_110 = arith.constant 0 : index
    %234 = vector.load %arg7[%c0_109, %c0_110] : memref<8x1xf32, #tpu.memory_space<vmem>>, vector<8x1xf32>
    tpu.vector_store %arg7[%c0_109, %c0_110], %233 {strides = array<i32>} : memref<8x1xf32, #tpu.memory_space<vmem>>, vector<8x1xf32>,
    return
  }
}

</mosaic_0001>

<llo_original>
// kernel: bilstm_forward.1
$region0: #{bilstm_forward.1}
  #allocation0 [shape = 'u32[]', space=smem, size = 0x4, offset = 0x4, fixed_abs, tag = 'smem constant byte address 0x4 - core index']
  #allocation1 [shape = 'u32[144,128]{1,0:T(1,128)}', space=vmem, size = 0x12000, scoped, tag = 'internal scratch']
  #allocation2 [shape = 'f32[64,256]{1,0:T(8,128)}', space=vmem, size = 0x10000, scoped, tag = 'scratch operand']
  #allocation3 [shape = 'f32[64,256]{1,0:T(8,128)}', space=vmem, size = 0x10000, scoped, tag = 'scratch operand']
  #allocation4 [shape = 'f32[1,1]{1,0:T(1,128)S(1)}', space=vmem, size = 0x200, scoped, tag = 'scoped memory for bilstm_forward.1']
  %s0 = inlined_call_operand.vmem [shape: f32[64,16], index: 0, kind: input, shape index: {}]
  %s1 = inlined_call_operand.vmem [shape: f32[16,256], index: 1, kind: input, shape index: {}]
  %s2 = inlined_call_operand.vmem [shape: f32[16,256], index: 2, kind: input, shape index: {}]
  %s3 = inlined_call_operand.vmem [shape: f32[1,256], index: 3, kind: input, shape index: {}]
  %s4 = inlined_call_operand.vmem [shape: f32[128,256], index: 4, kind: input, shape index: {}]
  %s5 = inlined_call_operand.vmem [shape: f32[1,128], index: 5, kind: input, shape index: {}]
  %s6 = inlined_call_operand.<no memory space> [shape: f32[1,1], index: 6, kind: input, shape index: {}]
  %s7 = inlined_call_operand.vmem [shape: f32[8,1], index: 7, kind: output, shape index: {}]
  %s8 = sld [smem:[#allocation0]]
  $region38: #{bilstm_forward.1} parent=0
    _
  %s10 = ssub.s32 1, %s8
  %s11 = scalar_select 0, %s10, %s8
  %v12 = vstv %s6
  %13 = vst [vmem:[#allocation4] sm:$0x1] %v12
  // Predicated region
  $region2: #{bilstm_forward.1} parent=0 // pred_check
    _
  $region3: #{bilstm_forward.1} parent=0 // pred_check_branch
    %15 = sbr.rel (0) target = $region5
  $region4: #{bilstm_forward.1} parent=0 // pred_region
    _
  $region5: #{bilstm_forward.1} parent=0 // pred_fallthru
    _
  // Predicated region
  $region6: #{bilstm_forward.1} parent=0 // pred_check
    _
  $region7: #{bilstm_forward.1} parent=0 // pred_check_branch
    %17 = sbr.rel (0) target = $region9
  $region8: #{bilstm_forward.1} parent=0 // pred_region
    _
  $region9: #{bilstm_forward.1} parent=0 // pred_fallthru
    _
  // Predicated region
  $region10: #{bilstm_forward.1} parent=0 // pred_check
    _
  $region11: #{bilstm_forward.1} parent=0 // pred_check_branch
    %19 = sbr.rel (0) target = $region13
  $region12: #{bilstm_forward.1} parent=0 // pred_region
    _
  $region13: #{bilstm_forward.1} parent=0 // pred_fallthru
    _
  // Predicated region
  $region14: #{bilstm_forward.1} parent=0 // pred_check
    _
  $region15: #{bilstm_forward.1} parent=0 // pred_check_branch
    %21 = sbr.rel (0) target = $region17
  $region16: #{bilstm_forward.1} parent=0 // pred_region
    _
  $region17: #{bilstm_forward.1} parent=0 // pred_fallthru
    _
  // Predicated region
  $region18: #{bilstm_forward.1} parent=0 // pred_check
    _
  $region19: #{bilstm_forward.1} parent=0 // pred_check_branch
    %23 = sbr.rel (0) target = $region21
  $region20: #{bilstm_forward.1} parent=0 // pred_region
    _
  $region21: #{bilstm_forward.1} parent=0 // pred_fallthru
    _
  // Predicated region
  $region22: #{bilstm_forward.1} parent=0 // pred_check
    _
  $region23: #{bilstm_forward.1} parent=0 // pred_check_branch
    %25 = sbr.rel (0) target = $region25
  $region24: #{bilstm_forward.1} parent=0 // pred_region
    _
  $region25: #{bilstm_forward.1} parent=0 // pred_fallthru
    _
  // Predicated region
  $region26: #{bilstm_forward.1} parent=0 // pred_check
    _
  $region27: #{bilstm_forward.1} parent=0 // pred_check_branch
    %27 = sbr.rel (0) target = $region29
  $region28: #{bilstm_forward.1} parent=0 // pred_region
    _
  $region29: #{bilstm_forward.1} parent=0 // pred_fallthru
    _
  %v28 = vld [vmem:[%s0] sm:$0xff]
  %v29 = vld [vmem:[%s0 + $0x8] sm:$0xff]
  %v30 = vld [vmem:[%s0 + $0x10] sm:$0xff]
  %v31 = vld [vmem:[%s0 + $0x18] sm:$0xff]
  %v32 = vld [vmem:[%s0 + $0x20] sm:$0xff]
  %v33 = vld [vmem:[%s0 + $0x28] sm:$0xff]
  %v34 = vld [vmem:[%s0 + $0x30] sm:$0xff]
  %v35 = vld [vmem:[%s0 + $0x38] sm:$0xff]
  %v36 = vld [vmem:[%s1] sm:$0xff]
  %v37 = vld [vmem:[%s1 + $0x8] sm:$0xff]
  %v38 = vld [vmem:[%s1 + $0x10] sm:$0xff]
  %v39 = vld [vmem:[%s1 + $0x18] sm:$0xff]
  %v40 = vld [vmem:[%s3] sm:$0x3]
  %v42 = vlaneseq
  %v43 = vshrl.u32 %v42, 7
  %v44 = vsub.s32 0, %v43
  %v45 = vrot.slane %v40, %v44
  %v46 = vlaneseq
  %v47 = vshrl.u32 %v46, 7
  %v48 = vsub.s32 1, %v47
  %v49 = vrot.slane %v40, %v48
  %vm52 = vcmask 130048
  %v54 = vsel %vm52, %v28, 0
  %v57 = vsel %vm52, %v29, 0
  %v60 = vsel %vm52, %v30, 0
  %v63 = vsel %vm52, %v31, 0
  %v66 = vsel %vm52, %v32, 0
  %v69 = vsel %vm52, %v33, 0
  %v72 = vsel %vm52, %v34, 0
  %v75 = vsel %vm52, %v35, 0
  %77 = vmatprep.subr.mxu0 0.0
  %78 = vmatpush1.msra.mxu0 0.0
  %79 = vmatprep.subr.mxu0 0.0
  %80 = vmatpush1.msra.mxu0 0.0
  %81 = vmatprep.subr.mxu0 0.0
  %82 = vmatpush1.msra.mxu0 0.0
  %83 = vmatprep.subr.mxu0 0.0
  %84 = vmatpush1.msra.mxu0 0.0
  %85 = vmatprep.subr.mxu0 0.0
  %86 = vmatpush1.msra.mxu0 0.0
  %87 = vmatprep.subr.mxu0 0.0
  %88 = vmatpush1.msra.mxu0 0.0
  %89 = vmatprep.subr.mxu0 0.0
  %90 = vmatpush1.msra.mxu0 0.0
  %91 = vmatprep.subr.mxu0 0.0
  %92 = vmatpush1.msra.mxu0 0.0
  %93 = vmatprep.subr.mxu0 0.0
  %94 = vmatpush1.msra.mxu0 0.0
  %95 = vmatprep.subr.mxu0 0.0
  %96 = vmatpush1.msra.mxu0 0.0
  %97 = vmatprep.subr.mxu0 0.0
  %98 = vmatpush1.msra.mxu0 0.0
  %99 = vmatprep.subr.mxu0 0.0
  %100 = vmatpush1.msra.mxu0 0.0
  %101 = vmatprep.subr.mxu0 0.0
  %102 = vmatpush1.msra.mxu0 0.0
  %103 = vmatprep.subr.mxu0 0.0
  %104 = vmatpush1.msra.mxu0 0.0
  %105 = vmatprep.subr.mxu0 %v39
  %106 = vmatpush1.msra.mxu0 %v38
  %107 = vmatprep.subr.mxu0 %v37
  %108 = vmatpush1.msra.mxu0 %v36
  %109 = vmatprep.subr.mxu0 0.0
  %110 = vmatpush2.msra.mxu0 0.0
  %111 = vmatprep.subr.mxu0 0.0
  %112 = vmatpush2.msra.mxu0 0.0
  %113 = vmatprep.subr.mxu0 0.0
  %114 = vmatpush2.msra.mxu0 0.0
  %115 = vmatprep.subr.mxu0 0.0
  %116 = vmatpush2.msra.mxu0 0.0
  %117 = vmatprep.subr.mxu0 0.0
  %118 = vmatpush2.msra.mxu0 0.0
  %119 = vmatprep.subr.mxu0 0.0
  %120 = vmatpush2.msra.mxu0 0.0
  %121 = vmatprep.subr.mxu0 0.0
  %122 = vmatpush2.msra.mxu0 0.0
  %123 = vmatprep.subr.mxu0 0.0
  %124 = vmatpush2.msra.mxu0 0.0
  %125 = vmatprep.subr.mxu0 0.0
  %126 = vmatpush2.msra.mxu0 0.0
  %127 = vmatprep.subr.mxu0 0.0
  %128 = vmatpush2.msra.mxu0 0.0
  %129 = vmatprep.subr.mxu0 0.0
  %130 = vmatpush2.msra.mxu0 0.0
  %131 = vmatprep.subr.mxu0 0.0
  %132 = vmatpush2.msra.mxu0 0.0
  %133 = vmatprep.subr.mxu0 0.0
  %134 = vmatpush2.msra.mxu0 0.0
  %135 = vmatprep.subr.mxu0 0.0
  %136 = vmatpush2.msra.mxu0 0.0
  %137 = vmatprep.subr.mxu0 0.0
  %138 = vmatpush2.msra.mxu0 0.0
  %139 = vmatprep.subr.mxu0 0.0
  %140 = vmatpush2.msra.mxu0 0.0
  %141 = vmatprep.mubr.f32.mxu0 0.0
  %142 = vmatmul.mubr.f32.gmra.mxu0 %v54
  %v143 = vpop.f32.mrf.mxu0
  %v144 = vadd.f32 %v45, %v143
  %v145 = vpop.f32.mrf.mxu0
  %v146 = vadd.f32 %v49, %v145
  %147 = vmatprep.mubr.f32.mxu0 0.0
  %148 = vmatmul.mubr.f32.gmra.mxu0 %v57
  %v149 = vpop.f32.mrf.mxu0
  %v150 = vadd.f32 %v45, %v149
  %v151 = vpop.f32.mrf.mxu0
  %v152 = vadd.f32 %v49, %v151
  %153 = vmatprep.mubr.f32.mxu0 0.0
  %154 = vmatmul.mubr.f32.gmra.mxu0 %v60
  %v155 = vpop.f32.mrf.mxu0
  %v156 = vadd.f32 %v45, %v155
  %v157 = vpop.f32.mrf.mxu0
  %v158 = vadd.f32 %v49, %v157
  %159 = vmatprep.mubr.f32.mxu0 0.0
  %160 = vmatmul.mubr.f32.gmra.mxu0 %v63
  %v161 = vpop.f32.mrf.mxu0
  %v162 = vadd.f32 %v45, %v161
  %v163 = vpop.f32.mrf.mxu0
  %v164 = vadd.f32 %v49, %v163
  %165 = vmatprep.mubr.f32.mxu0 0.0
  %166 = vmatmul.mubr.f32.gmra.mxu0 %v66
  %v167 = vpop.f32.mrf.mxu0
  %v168 = vadd.f32 %v45, %v167
  %v169 = vpop.f32.mrf.mxu0
  %v170 = vadd.f32 %v49, %v169
  %171 = vmatprep.mubr.f32.mxu0 0.0
  %172 = vmatmul.mubr.f32.gmra.mxu0 %v69
  %v173 = vpop.f32.mrf.mxu0
  %v174 = vadd.f32 %v45, %v173
  %v175 = vpop.f32.mrf.mxu0
  %v176 = vadd.f32 %v49, %v175
  %177 = vmatprep.mubr.f32.mxu0 0.0
  %178 = vmatmul.mubr.f32.gmra.mxu0 %v72
  %v179 = vpop.f32.mrf.mxu0
  %v180 = vadd.f32 %v45, %v179
  %v181 = vpop.f32.mrf.mxu0
  %v182 = vadd.f32 %v49, %v181
  %183 = vmatprep.mubr.f32.mxu0 0.0
  %184 = vmatmul.mubr.f32.gmra.mxu0 %v75
  %v185 = vpop.f32.mrf.mxu0
  %v186 = vadd.f32 %v45, %v185
  %v187 = vpop.f32.mrf.mxu0
  %v188 = vadd.f32 %v49, %v187
  %189 = vdwg.mxu0
  %190 = vst [vmem:[#allocation2] sm:$0xff] %v144
  %191 = vst [vmem:[#allocation2 + $0x8] sm:$0xff] %v146
  %192 = vst [vmem:[#allocation2 + $0x10] sm:$0xff] %v150
  %193 = vst [vmem:[#allocation2 + $0x18] sm:$0xff] %v152
  %194 = vst [vmem:[#allocation2 + $0x20] sm:$0xff] %v156
  %195 = vst [vmem:[#allocation2 + $0x28] sm:$0xff] %v158
  %196 = vst [vmem:[#allocation2 + $0x30] sm:$0xff] %v162
  %197 = vst [vmem:[#allocation2 + $0x38] sm:$0xff] %v164
  %198 = vst [vmem:[#allocation2 + $0x40] sm:$0xff] %v168
  %199 = vst [vmem:[#allocation2 + $0x48] sm:$0xff] %v170
  %200 = vst [vmem:[#allocation2 + $0x50] sm:$0xff] %v174
  %201 = vst [vmem:[#allocation2 + $0x58] sm:$0xff] %v176
  %202 = vst [vmem:[#allocation2 + $0x60] sm:$0xff] %v180
  %203 = vst [vmem:[#allocation2 + $0x68] sm:$0xff] %v182
  %204 = vst [vmem:[#allocation2 + $0x70] sm:$0xff] %v186
  %205 = vst [vmem:[#allocation2 + $0x78] sm:$0xff] %v188
  %v206 = vld [vmem:[%s2] sm:$0xff]
  %v207 = vld [vmem:[%s2 + $0x8] sm:$0xff]
  %v208 = vld [vmem:[%s2 + $0x10] sm:$0xff]
  %v209 = vld [vmem:[%s2 + $0x18] sm:$0xff]
  %210 = vmatprep.subr.mxu0 0.0
  %211 = vmatpush1.msra.mxu0 0.0
  %212 = vmatprep.subr.mxu0 0.0
  %213 = vmatpush1.msra.mxu0 0.0
  %214 = vmatprep.subr.mxu0 0.0
  %215 = vmatpush1.msra.mxu0 0.0
  %216 = vmatprep.subr.mxu0 0.0
  %217 = vmatpush1.msra.mxu0 0.0
  %218 = vmatprep.subr.mxu0 0.0
  %219 = vmatpush1.msra.mxu0 0.0
  %220 = vmatprep.subr.mxu0 0.0
  %221 = vmatpush1.msra.mxu0 0.0
  %222 = vmatprep.subr.mxu0 0.0
  %223 = vmatpush1.msra.mxu0 0.0
  %224 = vmatprep.subr.mxu0 0.0
  %225 = vmatpush1.msra.mxu0 0.0
  %226 = vmatprep.subr.mxu0 0.0
  %227 = vmatpush1.msra.mxu0 0.0
  %228 = vmatprep.subr.mxu0 0.0
  %229 = vmatpush1.msra.mxu0 0.0
  %230 = vmatprep.subr.mxu0 0.0
  %231 = vmatpush1.msra.mxu0 0.0
  %232 = vmatprep.subr.mxu0 0.0
  %233 = vmatpush1.msra.mxu0 0.0
  %234 = vmatprep.subr.mxu0 0.0
  %235 = vmatpush1.msra.mxu0 0.0
  %236 = vmatprep.subr.mxu0 0.0
  %237 = vmatpush1.msra.mxu0 0.0
  %238 = vmatprep.subr.mxu0 %v209
  %239 = vmatpush1.msra.mxu0 %v208
  %240 = vmatprep.subr.mxu0 %v207
  %241 = vmatpush1.msra.mxu0 %v206
  %242 = vmatprep.subr.mxu0 0.0
  %243 = vmatpush2.msra.mxu0 0.0
  %244 = vmatprep.subr.mxu0 0.0
  %245 = vmatpush2.msra.mxu0 0.0
  %246 = vmatprep.subr.mxu0 0.0
  %247 = vmatpush2.msra.mxu0 0.0
  %248 = vmatprep.subr.mxu0 0.0
  %249 = vmatpush2.msra.mxu0 0.0
  %250 = vmatprep.subr.mxu0 0.0
  %251 = vmatpush2.msra.mxu0 0.0
  %252 = vmatprep.subr.mxu0 0.0
  %253 = vmatpush2.msra.mxu0 0.0
  %254 = vmatprep.subr.mxu0 0.0
  %255 = vmatpush2.msra.mxu0 0.0
  %256 = vmatprep.subr.mxu0 0.0
  %257 = vmatpush2.msra.mxu0 0.0
  %258 = vmatprep.subr.mxu0 0.0
  %259 = vmatpush2.msra.mxu0 0.0
  %260 = vmatprep.subr.mxu0 0.0
  %261 = vmatpush2.msra.mxu0 0.0
  %262 = vmatprep.subr.mxu0 0.0
  %263 = vmatpush2.msra.mxu0 0.0
  %264 = vmatprep.subr.mxu0 0.0
  %265 = vmatpush2.msra.mxu0 0.0
  %266 = vmatprep.subr.mxu0 0.0
  %267 = vmatpush2.msra.mxu0 0.0
  %268 = vmatprep.subr.mxu0 0.0
  %269 = vmatpush2.msra.mxu0 0.0
  %270 = vmatprep.subr.mxu0 0.0
  %271 = vmatpush2.msra.mxu0 0.0
  %272 = vmatprep.subr.mxu0 0.0
  %273 = vmatpush2.msra.mxu0 0.0
  %274 = vmatprep.mubr.f32.mxu0 0.0
  %275 = vmatmul.mubr.f32.gmra.mxu0 %v54
  %v276 = vpop.f32.mrf.mxu0
  %v277 = vadd.f32 0.0, %v276
  %v278 = vpop.f32.mrf.mxu0
  %v279 = vadd.f32 0.0, %v278
  %280 = vmatprep.mubr.f32.mxu0 0.0
  %281 = vmatmul.mubr.f32.gmra.mxu0 %v57
  %v282 = vpop.f32.mrf.mxu0
  %v283 = vadd.f32 0.0, %v282
  %v284 = vpop.f32.mrf.mxu0
  %v285 = vadd.f32 0.0, %v284
  %286 = vmatprep.mubr.f32.mxu0 0.0
  %287 = vmatmul.mubr.f32.gmra.mxu0 %v60
  %v288 = vpop.f32.mrf.mxu0
  %v289 = vadd.f32 0.0, %v288
  %v290 = vpop.f32.mrf.mxu0
  %v291 = vadd.f32 0.0, %v290
  %292 = vmatprep.mubr.f32.mxu0 0.0
  %293 = vmatmul.mubr.f32.gmra.mxu0 %v63
  %v294 = vpop.f32.mrf.mxu0
  %v295 = vadd.f32 0.0, %v294
  %v296 = vpop.f32.mrf.mxu0
  %v297 = vadd.f32 0.0, %v296
  %298 = vmatprep.mubr.f32.mxu0 0.0
  %299 = vmatmul.mubr.f32.gmra.mxu0 %v66
  %v300 = vpop.f32.mrf.mxu0
  %v301 = vadd.f32 0.0, %v300
  %v302 = vpop.f32.mrf.mxu0
  %v303 = vadd.f32 0.0, %v302
  %304 = vmatprep.mubr.f32.mxu0 0.0
  %305 = vmatmul.mubr.f32.gmra.mxu0 %v69
  %v306 = vpop.f32.mrf.mxu0
  %v307 = vadd.f32 0.0, %v306
  %v308 = vpop.f32.mrf.mxu0
  %v309 = vadd.f32 0.0, %v308
  %310 = vmatprep.mubr.f32.mxu0 0.0
  %311 = vmatmul.mubr.f32.gmra.mxu0 %v72
  %v312 = vpop.f32.mrf.mxu0
  %v313 = vadd.f32 0.0, %v312
  %v314 = vpop.f32.mrf.mxu0
  %v315 = vadd.f32 0.0, %v314
  %316 = vmatprep.mubr.f32.mxu0 0.0
  %317 = vmatmul.mubr.f32.gmra.mxu0 %v75
  %v318 = vpop.f32.mrf.mxu0
  %v319 = vadd.f32 0.0, %v318
  %v320 = vpop.f32.mrf.mxu0
  %v321 = vadd.f32 0.0, %v320
  %322 = vdwg.mxu0
  %323 = vst [vmem:[#allocation3] sm:$0xff] %v277
  %324 = vst [vmem:[#allocation3 + $0x8] sm:$0xff] %v279
  %325 = vst [vmem:[#allocation3 + $0x10] sm:$0xff] %v283
  %326 = vst [vmem:[#allocation3 + $0x18] sm:$0xff] %v285
  %327 = vst [vmem:[#allocation3 + $0x20] sm:$0xff] %v289
  %328 = vst [vmem:[#allocation3 + $0x28] sm:$0xff] %v291
  %329 = vst [vmem:[#allocation3 + $0x30] sm:$0xff] %v295
  %330 = vst [vmem:[#allocation3 + $0x38] sm:$0xff] %v297
  %331 = vst [vmem:[#allocation3 + $0x40] sm:$0xff] %v301
  %332 = vst [vmem:[#allocation3 + $0x48] sm:$0xff] %v303
  %333 = vst [vmem:[#allocation3 + $0x50] sm:$0xff] %v307
  %334 = vst [vmem:[#allocation3 + $0x58] sm:$0xff] %v309
  %335 = vst [vmem:[#allocation3 + $0x60] sm:$0xff] %v313
  %336 = vst [vmem:[#allocation3 + $0x68] sm:$0xff] %v315
  %337 = vst [vmem:[#allocation3 + $0x70] sm:$0xff] %v319
  %338 = vst [vmem:[#allocation3 + $0x78] sm:$0xff] %v321
  %v339 = vlaneseq
  %v340 = vand.u32 %v339, 127
  %v341 = vadd.s32 %v340, 128
  %vm342 = vcmp.ge.s32.totalorder %v340, 128
  %vm343 = vcmp.ge.s32.totalorder %v341, 128
  %vm344 = vcmp.lt.s32.totalorder %v340, 192
  %vm345 = vcmp.lt.s32.totalorder %v341, 192
  %vm346 = vmand %vm342, %vm344
  %vm347 = vmand %vm343, %vm345
  %vm348 = vcmp.lt.s32.totalorder %v340, 64
  %v349 = vld [vmem:[#allocation2] sm:$0xff]
  %v350 = vld [vmem:[#allocation2 + $0x8] sm:$0xff]
  %v351 = vld [vmem:[#allocation3 + $0x70] sm:$0xff]
  %v352 = vld [vmem:[#allocation3 + $0x78] sm:$0xff]
  %v353 = vadd.f32 %v349, %v351
  %v354 = vadd.f32 %v350, %v352
  %v355 = vld [vmem:[%s4] sm:$0xff]
  %v356 = vld [vmem:[%s4 + $0x8] sm:$0xff]
  %v357 = vld [vmem:[%s4 + $0x10] sm:$0xff]
  %v358 = vld [vmem:[%s4 + $0x18] sm:$0xff]
  %v359 = vld [vmem:[%s4 + $0x20] sm:$0xff]
  %v360 = vld [vmem:[%s4 + $0x28] sm:$0xff]
  %v361 = vld [vmem:[%s4 + $0x30] sm:$0xff]
  %v362 = vld [vmem:[%s4 + $0x38] sm:$0xff]
  %v363 = vld [vmem:[%s4 + $0x40] sm:$0xff]
  %v364 = vld [vmem:[%s4 + $0x48] sm:$0xff]
  %v365 = vld [vmem:[%s4 + $0x50] sm:$0xff]
  %v366 = vld [vmem:[%s4 + $0x58] sm:$0xff]
  %v367 = vld [vmem:[%s4 + $0x60] sm:$0xff]
  %v368 = vld [vmem:[%s4 + $0x68] sm:$0xff]
  %v369 = vld [vmem:[%s4 + $0x70] sm:$0xff]
  %v370 = vld [vmem:[%s4 + $0x78] sm:$0xff]
  %v371 = vld [vmem:[%s4 + $0x80] sm:$0xff]
  %v372 = vld [vmem:[%s4 + $0x88] sm:$0xff]
  %v373 = vld [vmem:[%s4 + $0x90] sm:$0xff]
  %v374 = vld [vmem:[%s4 + $0x98] sm:$0xff]
  %v375 = vld [vmem:[%s4 + $0xa0] sm:$0xff]
  %v376 = vld [vmem:[%s4 + $0xa8] sm:$0xff]
  %v377 = vld [vmem:[%s4 + $0xb0] sm:$0xff]
  %v378 = vld [vmem:[%s4 + $0xb8] sm:$0xff]
  %v379 = vld [vmem:[%s4 + $0xc0] sm:$0xff]
  %v380 = vld [vmem:[%s4 + $0xc8] sm:$0xff]
  %v381 = vld [vmem:[%s4 + $0xd0] sm:$0xff]
  %v382 = vld [vmem:[%s4 + $0xd8] sm:$0xff]
  %v383 = vld [vmem:[%s4 + $0xe0] sm:$0xff]
  %v384 = vld [vmem:[%s4 + $0xe8] sm:$0xff]
  %v385 = vld [vmem:[%s4 + $0xf0] sm:$0xff]
  %v386 = vld [vmem:[%s4 + $0xf8] sm:$0xff]
  %387 = vmatprep.subr.mxu0 %v386
  %388 = vmatpush1.msra.mxu0 %v385
  %389 = vmatprep.subr.mxu0 %v384
  %390 = vmatpush1.msra.mxu0 %v383
  %391 = vmatprep.subr.mxu0 %v382
  %392 = vmatpush1.msra.mxu0 %v381
  %393 = vmatprep.subr.mxu0 %v380
  %394 = vmatpush1.msra.mxu0 %v379
  %395 = vmatprep.subr.mxu0 %v378
  %396 = vmatpush1.msra.mxu0 %v377
  %397 = vmatprep.subr.mxu0 %v376
  %398 = vmatpush1.msra.mxu0 %v375
  %399 = vmatprep.subr.mxu0 %v374
  %400 = vmatpush1.msra.mxu0 %v373
  %401 = vmatprep.subr.mxu0 %v372
  %402 = vmatpush1.msra.mxu0 %v371
  %403 = vmatprep.subr.mxu0 %v370
  %404 = vmatpush1.msra.mxu0 %v369
  %405 = vmatprep.subr.mxu0 %v368
  %406 = vmatpush1.msra.mxu0 %v367
  %407 = vmatprep.subr.mxu0 %v366
  %408 = vmatpush1.msra.mxu0 %v365
  %409 = vmatprep.subr.mxu0 %v364
  %410 = vmatpush1.msra.mxu0 %v363
  %411 = vmatprep.subr.mxu0 %v362
  %412 = vmatpush1.msra.mxu0 %v361
  %413 = vmatprep.subr.mxu0 %v360
  %414 = vmatpush1.msra.mxu0 %v359
  %415 = vmatprep.subr.mxu0 %v358
  %416 = vmatpush1.msra.mxu0 %v357
  %417 = vmatprep.subr.mxu0 %v356
  %418 = vmatpush1.msra.mxu0 %v355
  %419 = vmatprep.subr.mxu0 0.0
  %420 = vmatpush2.msra.mxu0 0.0
  %421 = vmatprep.subr.mxu0 0.0
  %422 = vmatpush2.msra.mxu0 0.0
  %423 = vmatprep.subr.mxu0 0.0
  %424 = vmatpush2.msra.mxu0 0.0
  %425 = vmatprep.subr.mxu0 0.0
  %426 = vmatpush2.msra.mxu0 0.0
  %427 = vmatprep.subr.mxu0 0.0
  %428 = vmatpush2.msra.mxu0 0.0
  %429 = vmatprep.subr.mxu0 0.0
  %430 = vmatpush2.msra.mxu0 0.0
  %431 = vmatprep.subr.mxu0 0.0
  %432 = vmatpush2.msra.mxu0 0.0
  %433 = vmatprep.subr.mxu0 0.0
  %434 = vmatpush2.msra.mxu0 0.0
  %435 = vmatprep.subr.mxu0 0.0
  %436 = vmatpush2.msra.mxu0 0.0
  %437 = vmatprep.subr.mxu0 0.0
  %438 = vmatpush2.msra.mxu0 0.0
  %439 = vmatprep.subr.mxu0 0.0
  %440 = vmatpush2.msra.mxu0 0.0
  %441 = vmatprep.subr.mxu0 0.0
  %442 = vmatpush2.msra.mxu0 0.0
  %443 = vmatprep.subr.mxu0 0.0
  %444 = vmatpush2.msra.mxu0 0.0
  %445 = vmatprep.subr.mxu0 0.0
  %446 = vmatpush2.msra.mxu0 0.0
  %447 = vmatprep.subr.mxu0 0.0
  %448 = vmatpush2.msra.mxu0 0.0
  %449 = vmatprep.subr.mxu0 0.0
  %450 = vmatpush2.msra.mxu0 0.0
  %451 = vmatprep.mubr.f32.mxu0 0.0
  %452 = vmatmul.mubr.f32.gmra.mxu0 0.0
  %v453 = vpop.f32.mrf.mxu0
  %v454 = vadd.f32 0.0, %v453
  %v455 = vpop.f32.mrf.mxu0
  %v456 = vadd.f32 0.0, %v455
  %457 = vdwg.mxu0
  %v458 = vadd.f32 %v353, %v454
  %v459 = vadd.f32 %v354, %v456
  %v460 = vmul.f32 %v458, 0.5
  %v461 = vmul.f32 %v459, 0.5
  %v462 = vsel %vm346, %v458, %v460
  %v463 = vsel %vm347, %v459, %v461
  %v464 = vtanh.pop %v462
  %v465 = vtanh.pop %v463
  %v466 = vmul.f32 %v464, 0.5
  %v467 = vmul.f32 %v465, 0.5
  %v468 = vadd.f32 %v466, 0.5
  %v469 = vadd.f32 %v467, 0.5
  %v470 = vsel %vm346, %v464, %v468
  %v471 = vsel %vm347, %v465, %v469
  %v472 = vsel %vm348, %v471, 0.0
  %v473 = vmul.f32 %v470, %v472
  %474 = vrot.lane.b32.xlu0 %v473, 64
  %v475 = vpop.permute.xlu0 %474
  %v476 = vadd.f32 %v473, %v475
  %477 = vrot.lane.b32.xlu0 %v471, 64
  %v478 = vpop.permute.xlu0 %477
  %v479 = vsel %vm348, %v478, %v471
  %v480 = vtanh.pop %v476
  %v481 = vmul.f32 %v479, %v480
  %v482 = vld [vmem:[#allocation2 + $0x10] sm:$0xff]
  %v483 = vld [vmem:[#allocation2 + $0x18] sm:$0xff]
  %v484 = vld [vmem:[#allocation3 + $0x60] sm:$0xff]
  %v485 = vld [vmem:[#allocation3 + $0x68] sm:$0xff]
  %v486 = vadd.f32 %v482, %v484
  %v487 = vadd.f32 %v483, %v485
  %488 = vmatprep.subr.mxu0 %v386
  %489 = vmatpush1.msra.mxu0 %v385
  %490 = vmatprep.subr.mxu0 %v384
  %491 = vmatpush1.msra.mxu0 %v383
  %492 = vmatprep.subr.mxu0 %v382
  %493 = vmatpush1.msra.mxu0 %v381
  %494 = vmatprep.subr.mxu0 %v380
  %495 = vmatpush1.msra.mxu0 %v379
  %496 = vmatprep.subr.mxu0 %v378
  %497 = vmatpush1.msra.mxu0 %v377
  %498 = vmatprep.subr.mxu0 %v376
  %499 = vmatpush1.msra.mxu0 %v375
  %500 = vmatprep.subr.mxu0 %v374
  %501 = vmatpush1.msra.mxu0 %v373
  %502 = vmatprep.subr.mxu0 %v372
  %503 = vmatpush1.msra.mxu0 %v371
  %504 = vmatprep.subr.mxu0 %v370
  %505 = vmatpush1.msra.mxu0 %v369
  %506 = vmatprep.subr.mxu0 %v368
  %507 = vmatpush1.msra.mxu0 %v367
  %508 = vmatprep.subr.mxu0 %v366
  %509 = vmatpush1.msra.mxu0 %v365
  %510 = vmatprep.subr.mxu0 %v364
  %511 = vmatpush1.msra.mxu0 %v363
  %512 = vmatprep.subr.mxu0 %v362
  %513 = vmatpush1.msra.mxu0 %v361
  %514 = vmatprep.subr.mxu0 %v360
  %515 = vmatpush1.msra.mxu0 %v359
  %516 = vmatprep.subr.mxu0 %v358
  %517 = vmatpush1.msra.mxu0 %v357
  %518 = vmatprep.subr.mxu0 %v356
  %519 = vmatpush1.msra.mxu0 %v355
  %520 = vmatprep.subr.mxu0 0.0
  %521 = vmatpush2.msra.mxu0 0.0
  %522 = vmatprep.subr.mxu0 0.0
  %523 = vmatpush2.msra.mxu0 0.0
  %524 = vmatprep.subr.mxu0 0.0
  %525 = vmatpush2.msra.mxu0 0.0
  %526 = vmatprep.subr.mxu0 0.0
  %527 = vmatpush2.msra.mxu0 0.0
  %528 = vmatprep.subr.mxu0 0.0
  %529 = vmatpush2.msra.mxu0 0.0
  %530 = vmatprep.subr.mxu0 0.0
  %531 = vmatpush2.msra.mxu0 0.0
  %532 = vmatprep.subr.mxu0 0.0
  %533 = vmatpush2.msra.mxu0 0.0
  %534 = vmatprep.subr.mxu0 0.0
  %535 = vmatpush2.msra.mxu0 0.0
  %536 = vmatprep.subr.mxu0 0.0
  %537 = vmatpush2.msra.mxu0 0.0
  %538 = vmatprep.subr.mxu0 0.0
  %539 = vmatpush2.msra.mxu0 0.0
  %540 = vmatprep.subr.mxu0 0.0
  %541 = vmatpush2.msra.mxu0 0.0
  %542 = vmatprep.subr.mxu0 0.0
  %543 = vmatpush2.msra.mxu0 0.0
  %544 = vmatprep.subr.mxu0 0.0
  %545 = vmatpush2.msra.mxu0 0.0
  %546 = vmatprep.subr.mxu0 0.0
  %547 = vmatpush2.msra.mxu0 0.0
  %548 = vmatprep.subr.mxu0 0.0
  %549 = vmatpush2.msra.mxu0 0.0
  %550 = vmatprep.subr.mxu0 0.0
  %551 = vmatpush2.msra.mxu0 0.0
  %552 = vmatprep.mubr.f32.mxu0 0.0
  %553 = vmatmul.mubr.f32.gmra.mxu0 %v481
  %v554 = vpop.f32.mrf.mxu0
  %v555 = vadd.f32 0.0, %v554
  %v556 = vpop.f32.mrf.mxu0
  %v557 = vadd.f32 0.0, %v556
  %558 = vdwg.mxu0
  %v559 = vadd.f32 %v486, %v555
  %v560 = vadd.f32 %v487, %v557
  %v561 = vmul.f32 %v559, 0.5
  %v562 = vmul.f32 %v560, 0.5
  %v563 = vsel %vm346, %v559, %v561
  %v564 = vsel %vm347, %v560, %v562
  %v565 = vtanh.pop %v563
  %v566 = vtanh.pop %v564
  %v567 = vmul.f32 %v565, 0.5
  %v568 = vmul.f32 %v566, 0.5
  %v569 = vadd.f32 %v567, 0.5
  %v570 = vadd.f32 %v568, 0.5
  %v571 = vsel %vm346, %v565, %v569
  %v572 = vsel %vm347, %v566, %v570
  %v573 = vsel %vm348, %v572, %v476
  %v574 = vmul.f32 %v571, %v573
  %575 = vrot.lane.b32.xlu0 %v574, 64
  %v576 = vpop.permute.xlu0 %575
  %v577 = vadd.f32 %v574, %v576
  %578 = vrot.lane.b32.xlu0 %v572, 64
  %v579 = vpop.permute.xlu0 %578
  %v580 = vsel %vm348, %v579, %v572
  %v581 = vtanh.pop %v577
  %v582 = vmul.f32 %v580, %v581
  %v583 = vld [vmem:[#allocation2 + $0x20] sm:$0xff]
  %v584 = vld [vmem:[#allocation2 + $0x28] sm:$0xff]
  %v585 = vld [vmem:[#allocation3 + $0x50] sm:$0xff]
  %v586 = vld [vmem:[#allocation3 + $0x58] sm:$0xff]
  %v587 = vadd.f32 %v583, %v585
  %v588 = vadd.f32 %v584, %v586
  %589 = vmatprep.subr.mxu0 %v386
  %590 = vmatpush1.msra.mxu0 %v385
  %591 = vmatprep.subr.mxu0 %v384
  %592 = vmatpush1.msra.mxu0 %v383
  %593 = vmatprep.subr.mxu0 %v382
  %594 = vmatpush1.msra.mxu0 %v381
  %595 = vmatprep.subr.mxu0 %v380
  %596 = vmatpush1.msra.mxu0 %v379
  %597 = vmatprep.subr.mxu0 %v378
  %598 = vmatpush1.msra.mxu0 %v377
  %599 = vmatprep.subr.mxu0 %v376
  %600 = vmatpush1.msra.mxu0 %v375
  %601 = vmatprep.subr.mxu0 %v374
  %602 = vmatpush1.msra.mxu0 %v373
  %603 = vmatprep.subr.mxu0 %v372
  %604 = vmatpush1.msra.mxu0 %v371
  %605 = vmatprep.subr.mxu0 %v370
  %606 = vmatpush1.msra.mxu0 %v369
  %607 = vmatprep.subr.mxu0 %v368
  %608 = vmatpush1.msra.mxu0 %v367
  %609 = vmatprep.subr.mxu0 %v366
  %610 = vmatpush1.msra.mxu0 %v365
  %611 = vmatprep.subr.mxu0 %v364
  %612 = vmatpush1.msra.mxu0 %v363
  %613 = vmatprep.subr.mxu0 %v362
  %614 = vmatpush1.msra.mxu0 %v361
  %615 = vmatprep.subr.mxu0 %v360
  %616 = vmatpush1.msra.mxu0 %v359
  %617 = vmatprep.subr.mxu0 %v358
  %618 = vmatpush1.msra.mxu0 %v357
  %619 = vmatprep.subr.mxu0 %v356
  %620 = vmatpush1.msra.mxu0 %v355
  %621 = vmatprep.subr.mxu0 0.0
  %622 = vmatpush2.msra.mxu0 0.0
  %623 = vmatprep.subr.mxu0 0.0
  %624 = vmatpush2.msra.mxu0 0.0
  %625 = vmatprep.subr.mxu0 0.0
  %626 = vmatpush2.msra.mxu0 0.0
  %627 = vmatprep.subr.mxu0 0.0
  %628 = vmatpush2.msra.mxu0 0.0
  %629 = vmatprep.subr.mxu0 0.0
  %630 = vmatpush2.msra.mxu0 0.0
  %631 = vmatprep.subr.mxu0 0.0
  %632 = vmatpush2.msra.mxu0 0.0
  %633 = vmatprep.subr.mxu0 0.0
  %634 = vmatpush2.msra.mxu0 0.0
  %635 = vmatprep.subr.mxu0 0.0
  %636 = vmatpush2.msra.mxu0 0.0
  %637 = vmatprep.subr.mxu0 0.0
  %638 = vmatpush2.msra.mxu0 0.0
  %639 = vmatprep.subr.mxu0 0.0
  %640 = vmatpush2.msra.mxu0 0.0
  %641 = vmatprep.subr.mxu0 0.0
  %642 = vmatpush2.msra.mxu0 0.0
  %643 = vmatprep.subr.mxu0 0.0
  %644 = vmatpush2.msra.mxu0 0.0
  %645 = vmatprep.subr.mxu0 0.0
  %646 = vmatpush2.msra.mxu0 0.0
  %647 = vmatprep.subr.mxu0 0.0
  %648 = vmatpush2.msra.mxu0 0.0
  %649 = vmatprep.subr.mxu0 0.0
  %650 = vmatpush2.msra.mxu0 0.0
  %651 = vmatprep.subr.mxu0 0.0
  %652 = vmatpush2.msra.mxu0 0.0
  %653 = vmatprep.mubr.f32.mxu0 0.0
  %654 = vmatmul.mubr.f32.gmra.mxu0 %v582
  %v655 = vpop.f32.mrf.mxu0
  %v656 = vadd.f32 0.0, %v655
  %v657 = vpop.f32.mrf.mxu0
  %v658 = vadd.f32 0.0, %v657
  %659 = vdwg.mxu0
  %v660 = vadd.f32 %v587, %v656
  %v661 = vadd.f32 %v588, %v658
  %v662 = vmul.f32 %v660, 0.5
  %v663 = vmul.f32 %v661, 0.5
  %v664 = vsel %vm346, %v660, %v662
  %v665 = vsel %vm347, %v661, %v663
  %v666 = vtanh.pop %v664
  %v667 = vtanh.pop %v665
  %v668 = vmul.f32 %v666, 0.5
  %v669 = vmul.f32 %v667, 0.5
  %v670 = vadd.f32 %v668, 0.5
  %v671 = vadd.f32 %v669, 0.5
  %v672 = vsel %vm346, %v666, %v670
  %v673 = vsel %vm347, %v667, %v671
  %v674 = vsel %vm348, %v673, %v577
  %v675 = vmul.f32 %v672, %v674
  %676 = vrot.lane.b32.xlu0 %v675, 64
  %v677 = vpop.permute.xlu0 %676
  %v678 = vadd.f32 %v675, %v677
  %679 = vrot.lane.b32.xlu0 %v673, 64
  %v680 = vpop.permute.xlu0 %679
  %v681 = vsel %vm348, %v680, %v673
  %v682 = vtanh.pop %v678
  %v683 = vmul.f32 %v681, %v682
  %v684 = vld [vmem:[#allocation2 + $0x30] sm:$0xff]
  %v685 = vld [vmem:[#allocation2 + $0x38] sm:$0xff]
  %v686 = vld [vmem:[#allocation3 + $0x40] sm:$0xff]
  %v687 = vld [vmem:[#allocation3 + $0x48] sm:$0xff]
  %v688 = vadd.f32 %v684, %v686
  %v689 = vadd.f32 %v685, %v687
  %690 = vmatprep.subr.mxu0 %v386
  %691 = vmatpush1.msra.mxu0 %v385
  %692 = vmatprep.subr.mxu0 %v384
  %693 = vmatpush1.msra.mxu0 %v383
  %694 = vmatprep.subr.mxu0 %v382
  %695 = vmatpush1.msra.mxu0 %v381
  %696 = vmatprep.subr.mxu0 %v380
  %697 = vmatpush1.msra.mxu0 %v379
  %698 = vmatprep.subr.mxu0 %v378
  %699 = vmatpush1.msra.mxu0 %v377
  %700 = vmatprep.subr.mxu0 %v376
  %701 = vmatpush1.msra.mxu0 %v375
  %702 = vmatprep.subr.mxu0 %v374
  %703 = vmatpush1.msra.mxu0 %v373
  %704 = vmatprep.subr.mxu0 %v372
  %705 = vmatpush1.msra.mxu0 %v371
  %706 = vmatprep.subr.mxu0 %v370
  %707 = vmatpush1.msra.mxu0 %v369
  %708 = vmatprep.subr.mxu0 %v368
  %709 = vmatpush1.msra.mxu0 %v367
  %710 = vmatprep.subr.mxu0 %v366
  %711 = vmatpush1.msra.mxu0 %v365
  %712 = vmatprep.subr.mxu0 %v364
  %713 = vmatpush1.msra.mxu0 %v363
  %714 = vmatprep.subr.mxu0 %v362
  %715 = vmatpush1.msra.mxu0 %v361
  %716 = vmatprep.subr.mxu0 %v360
  %717 = vmatpush1.msra.mxu0 %v359
  %718 = vmatprep.subr.mxu0 %v358
  %719 = vmatpush1.msra.mxu0 %v357
  %720 = vmatprep.subr.mxu0 %v356
  %721 = vmatpush1.msra.mxu0 %v355
  %722 = vmatprep.subr.mxu0 0.0
  %723 = vmatpush2.msra.mxu0 0.0
  %724 = vmatprep.subr.mxu0 0.0
  %725 = vmatpush2.msra.mxu0 0.0
  %726 = vmatprep.subr.mxu0 0.0
  %727 = vmatpush2.msra.mxu0 0.0
  %728 = vmatprep.subr.mxu0 0.0
  %729 = vmatpush2.msra.mxu0 0.0
  %730 = vmatprep.subr.mxu0 0.0
  %731 = vmatpush2.msra.mxu0 0.0
  %732 = vmatprep.subr.mxu0 0.0
  %733 = vmatpush2.msra.mxu0 0.0
  %734 = vmatprep.subr.mxu0 0.0
  %735 = vmatpush2.msra.mxu0 0.0
  %736 = vmatprep.subr.mxu0 0.0
  %737 = vmatpush2.msra.mxu0 0.0
  %738 = vmatprep.subr.mxu0 0.0
  %739 = vmatpush2.msra.mxu0 0.0
  %740 = vmatprep.subr.mxu0 0.0
  %741 = vmatpush2.msra.mxu0 0.0
  %742 = vmatprep.subr.mxu0 0.0
  %743 = vmatpush2.msra.mxu0 0.0
  %744 = vmatprep.subr.mxu0 0.0
  %745 = vmatpush2.msra.mxu0 0.0
  %746 = vmatprep.subr.mxu0 0.0
  %747 = vmatpush2.msra.mxu0 0.0
  %748 = vmatprep.subr.mxu0 0.0
  %749 = vmatpush2.msra.mxu0 0.0
  %750 = vmatprep.subr.mxu0 0.0
  %751 = vmatpush2.msra.mxu0 0.0
  %752 = vmatprep.subr.mxu0 0.0
  %753 = vmatpush2.msra.mxu0 0.0
  %754 = vmatprep.mubr.f32.mxu0 0.0
  %755 = vmatmul.mubr.f32.gmra.mxu0 %v683
  %v756 = vpop.f32.mrf.mxu0
  %v757 = vadd.f32 0.0, %v756
  %v758 = vpop.f32.mrf.mxu0
  %v759 = vadd.f32 0.0, %v758
  %760 = vdwg.mxu0
  %v761 = vadd.f32 %v688, %v757
  %v762 = vadd.f32 %v689, %v759
  %v763 = vmul.f32 %v761, 0.5
  %v764 = vmul.f32 %v762, 0.5
  %v765 = vsel %vm346, %v761, %v763
  %v766 = vsel %vm347, %v762, %v764
  %v767 = vtanh.pop %v765
  %v768 = vtanh.pop %v766
  %v769 = vmul.f32 %v767, 0.5
  %v770 = vmul.f32 %v768, 0.5
  %v771 = vadd.f32 %v769, 0.5
  %v772 = vadd.f32 %v770, 0.5
  %v773 = vsel %vm346, %v767, %v771
  %v774 = vsel %vm347, %v768, %v772
  %v775 = vsel %vm348, %v774, %v678
  %v776 = vmul.f32 %v773, %v775
  %777 = vrot.lane.b32.xlu0 %v776, 64
  %v778 = vpop.permute.xlu0 %777
  %v779 = vadd.f32 %v776, %v778
  %780 = vrot.lane.b32.xlu0 %v774, 64
  %v781 = vpop.permute.xlu0 %780
  %v782 = vsel %vm348, %v781, %v774
  %v783 = vtanh.pop %v779
  %v784 = vmul.f32 %v782, %v783
  %v785 = vld [vmem:[#allocation2 + $0x40] sm:$0xff]
  %v786 = vld [vmem:[#allocation2 + $0x48] sm:$0xff]
  %v787 = vld [vmem:[#allocation3 + $0x30] sm:$0xff]
  %v788 = vld [vmem:[#allocation3 + $0x38] sm:$0xff]
  %v789 = vadd.f32 %v785, %v787
  %v790 = vadd.f32 %v786, %v788
  %791 = vmatprep.subr.mxu0 %v386
  %792 = vmatpush1.msra.mxu0 %v385
  %793 = vmatprep.subr.mxu0 %v384
  %794 = vmatpush1.msra.mxu0 %v383
  %795 = vmatprep.subr.mxu0 %v382
  %796 = vmatpush1.msra.mxu0 %v381
  %797 = vmatprep.subr.mxu0 %v380
  %798 = vmatpush1.msra.mxu0 %v379
  %799 = vmatprep.subr.mxu0 %v378
  %800 = vmatpush1.msra.mxu0 %v377
  %801 = vmatprep.subr.mxu0 %v376
  %802 = vmatpush1.msra.mxu0 %v375
  %803 = vmatprep.subr.mxu0 %v374
  %804 = vmatpush1.msra.mxu0 %v373
  %805 = vmatprep.subr.mxu0 %v372
  %806 = vmatpush1.msra.mxu0 %v371
  %807 = vmatprep.subr.mxu0 %v370
  %808 = vmatpush1.msra.mxu0 %v369
  %809 = vmatprep.subr.mxu0 %v368
  %810 = vmatpush1.msra.mxu0 %v367
  %811 = vmatprep.subr.mxu0 %v366
  %812 = vmatpush1.msra.mxu0 %v365
  %813 = vmatprep.subr.mxu0 %v364
  %814 = vmatpush1.msra.mxu0 %v363
  %815 = vmatprep.subr.mxu0 %v362
  %816 = vmatpush1.msra.mxu0 %v361
  %817 = vmatprep.subr.mxu0 %v360
  %818 = vmatpush1.msra.mxu0 %v359
  %819 = vmatprep.subr.mxu0 %v358
  %820 = vmatpush1.msra.mxu0 %v357
  %821 = vmatprep.subr.mxu0 %v356
  %822 = vmatpush1.msra.mxu0 %v355
  %823 = vmatprep.subr.mxu0 0.0
  %824 = vmatpush2.msra.mxu0 0.0
  %825 = vmatprep.subr.mxu0 0.0
  %826 = vmatpush2.msra.mxu0 0.0
  %827 = vmatprep.subr.mxu0 0.0
  %828 = vmatpush2.msra.mxu0 0.0
  %829 = vmatprep.subr.mxu0 0.0
  %830 = vmatpush2.msra.mxu0 0.0
  %831 = vmatprep.subr.mxu0 0.0
  %832 = vmatpush2.msra.mxu0 0.0
  %833 = vmatprep.subr.mxu0 0.0
  %834 = vmatpush2.msra.mxu0 0.0
  %835 = vmatprep.subr.mxu0 0.0
  %836 = vmatpush2.msra.mxu0 0.0
  %837 = vmatprep.subr.mxu0 0.0
  %838 = vmatpush2.msra.mxu0 0.0
  %839 = vmatprep.subr.mxu0 0.0
  %840 = vmatpush2.msra.mxu0 0.0
  %841 = vmatprep.subr.mxu0 0.0
  %842 = vmatpush2.msra.mxu0 0.0
  %843 = vmatprep.subr.mxu0 0.0
  %844 = vmatpush2.msra.mxu0 0.0
  %845 = vmatprep.subr.mxu0 0.0
  %846 = vmatpush2.msra.mxu0 0.0
  %847 = vmatprep.subr.mxu0 0.0
  %848 = vmatpush2.msra.mxu0 0.0
  %849 = vmatprep.subr.mxu0 0.0
  %850 = vmatpush2.msra.mxu0 0.0
  %851 = vmatprep.subr.mxu0 0.0
  %852 = vmatpush2.msra.mxu0 0.0
  %853 = vmatprep.subr.mxu0 0.0
  %854 = vmatpush2.msra.mxu0 0.0
  %855 = vmatprep.mubr.f32.mxu0 0.0
  %856 = vmatmul.mubr.f32.gmra.mxu0 %v784
  %v857 = vpop.f32.mrf.mxu0
  %v858 = vadd.f32 0.0, %v857
  %v859 = vpop.f32.mrf.mxu0
  %v860 = vadd.f32 0.0, %v859
  %861 = vdwg.mxu0
  %v862 = vadd.f32 %v789, %v858
  %v863 = vadd.f32 %v790, %v860
  %v864 = vmul.f32 %v862, 0.5
  %v865 = vmul.f32 %v863, 0.5
  %v866 = vsel %vm346, %v862, %v864
  %v867 = vsel %vm347, %v863, %v865
  %v868 = vtanh.pop %v866
  %v869 = vtanh.pop %v867
  %v870 = vmul.f32 %v868, 0.5
  %v871 = vmul.f32 %v869, 0.5
  %v872 = vadd.f32 %v870, 0.5
  %v873 = vadd.f32 %v871, 0.5
  %v874 = vsel %vm346, %v868, %v872
  %v875 = vsel %vm347, %v869, %v873
  %v876 = vsel %vm348, %v875, %v779
  %v877 = vmul.f32 %v874, %v876
  %878 = vrot.lane.b32.xlu0 %v877, 64
  %v879 = vpop.permute.xlu0 %878
  %v880 = vadd.f32 %v877, %v879
  %881 = vrot.lane.b32.xlu0 %v875, 64
  %v882 = vpop.permute.xlu0 %881
  %v883 = vsel %vm348, %v882, %v875
  %v884 = vtanh.pop %v880
  %v885 = vmul.f32 %v883, %v884
  %v886 = vld [vmem:[#allocation2 + $0x50] sm:$0xff]
  %v887 = vld [vmem:[#allocation2 + $0x58] sm:$0xff]
  %v888 = vld [vmem:[#allocation3 + $0x20] sm:$0xff]
  %v889 = vld [vmem:[#allocation3 + $0x28] sm:$0xff]
  %v890 = vadd.f32 %v886, %v888
  %v891 = vadd.f32 %v887, %v889
  %892 = vmatprep.subr.mxu0 %v386
  %893 = vmatpush1.msra.mxu0 %v385
  %894 = vmatprep.subr.mxu0 %v384
  %895 = vmatpush1.msra.mxu0 %v383
  %896 = vmatprep.subr.mxu0 %v382
  %897 = vmatpush1.msra.mxu0 %v381
  %898 = vmatprep.subr.mxu0 %v380
  %899 = vmatpush1.msra.mxu0 %v379
  %900 = vmatprep.subr.mxu0 %v378
  %901 = vmatpush1.msra.mxu0 %v377
  %902 = vmatprep.subr.mxu0 %v376
  %903 = vmatpush1.msra.mxu0 %v375
  %904 = vmatprep.subr.mxu0 %v374
  %905 = vmatpush1.msra.mxu0 %v373
  %906 = vmatprep.subr.mxu0 %v372
  %907 = vmatpush1.msra.mxu0 %v371
  %908 = vmatprep.subr.mxu0 %v370
  %909 = vmatpush1.msra.mxu0 %v369
  %910 = vmatprep.subr.mxu0 %v368
  %911 = vmatpush1.msra.mxu0 %v367
  %912 = vmatprep.subr.mxu0 %v366
  %913 = vmatpush1.msra.mxu0 %v365
  %914 = vmatprep.subr.mxu0 %v364
  %915 = vmatpush1.msra.mxu0 %v363
  %916 = vmatprep.subr.mxu0 %v362
  %917 = vmatpush1.msra.mxu0 %v361
  %918 = vmatprep.subr.mxu0 %v360
  %919 = vmatpush1.msra.mxu0 %v359
  %920 = vmatprep.subr.mxu0 %v358
  %921 = vmatpush1.msra.mxu0 %v357
  %922 = vmatprep.subr.mxu0 %v356
  %923 = vmatpush1.msra.mxu0 %v355
  %924 = vmatprep.subr.mxu0 0.0
  %925 = vmatpush2.msra.mxu0 0.0
  %926 = vmatprep.subr.mxu0 0.0
  %927 = vmatpush2.msra.mxu0 0.0
  %928 = vmatprep.subr.mxu0 0.0
  %929 = vmatpush2.msra.mxu0 0.0
  %930 = vmatprep.subr.mxu0 0.0
  %931 = vmatpush2.msra.mxu0 0.0
  %932 = vmatprep.subr.mxu0 0.0
  %933 = vmatpush2.msra.mxu0 0.0
  %934 = vmatprep.subr.mxu0 0.0
  %935 = vmatpush2.msra.mxu0 0.0
  %936 = vmatprep.subr.mxu0 0.0
  %937 = vmatpush2.msra.mxu0 0.0
  %938 = vmatprep.subr.mxu0 0.0
  %939 = vmatpush2.msra.mxu0 0.0
  %940 = vmatprep.subr.mxu0 0.0
  %941 = vmatpush2.msra.mxu0 0.0
  %942 = vmatprep.subr.mxu0 0.0
  %943 = vmatpush2.msra.mxu0 0.0
  %944 = vmatprep.subr.mxu0 0.0
  %945 = vmatpush2.msra.mxu0 0.0
  %946 = vmatprep.subr.mxu0 0.0
  %947 = vmatpush2.msra.mxu0 0.0
  %948 = vmatprep.subr.mxu0 0.0
  %949 = vmatpush2.msra.mxu0 0.0
  %950 = vmatprep.subr.mxu0 0.0
  %951 = vmatpush2.msra.mxu0 0.0
  %952 = vmatprep.subr.mxu0 0.0
  %953 = vmatpush2.msra.mxu0 0.0
  %954 = vmatprep.subr.mxu0 0.0
  %955 = vmatpush2.msra.mxu0 0.0
  %956 = vmatprep.mubr.f32.mxu0 0.0
  %957 = vmatmul.mubr.f32.gmra.mxu0 %v885
  %v958 = vpop.f32.mrf.mxu0
  %v959 = vadd.f32 0.0, %v958
  %v960 = vpop.f32.mrf.mxu0
  %v961 = vadd.f32 0.0, %v960
  %962 = vdwg.mxu0
  %v963 = vadd.f32 %v890, %v959
  %v964 = vadd.f32 %v891, %v961
  %v965 = vmul.f32 %v963, 0.5
  %v966 = vmul.f32 %v964, 0.5
  %v967 = vsel %vm346, %v963, %v965
  %v968 = vsel %vm347, %v964, %v966
  %v969 = vtanh.pop %v967
  %v970 = vtanh.pop %v968
  %v971 = vmul.f32 %v969, 0.5
  %v972 = vmul.f32 %v970, 0.5
  %v973 = vadd.f32 %v971, 0.5
  %v974 = vadd.f32 %v972, 0.5
  %v975 = vsel %vm346, %v969, %v973
  %v976 = vsel %vm347, %v970, %v974
  %v977 = vsel %vm348, %v976, %v880
  %v978 = vmul.f32 %v975, %v977
  %979 = vrot.lane.b32.xlu0 %v978, 64
  %v980 = vpop.permute.xlu0 %979
  %v981 = vadd.f32 %v978, %v980
  %982 = vrot.lane.b32.xlu0 %v976, 64
  %v983 = vpop.permute.xlu0 %982
  %v984 = vsel %vm348, %v983, %v976
  %v985 = vtanh.pop %v981
  %v986 = vmul.f32 %v984, %v985
  %v987 = vld [vmem:[#allocation2 + $0x60] sm:$0xff]
  %v988 = vld [vmem:[#allocation2 + $0x68] sm:$0xff]
  %v989 = vld [vmem:[#allocation3 + $0x10] sm:$0xff]
  %v990 = vld [vmem:[#allocation3 + $0x18] sm:$0xff]
  %v991 = vadd.f32 %v987, %v989
  %v992 = vadd.f32 %v988, %v990
  %993 = vmatprep.subr.mxu0 %v386
  %994 = vmatpush1.msra.mxu0 %v385
  %995 = vmatprep.subr.mxu0 %v384
  %996 = vmatpush1.msra.mxu0 %v383
  %997 = vmatprep.subr.mxu0 %v382
  %998 = vmatpush1.msra.mxu0 %v381
  %999 = vmatprep.subr.mxu0 %v380
  %1000 = vmatpush1.msra.mxu0 %v379
  %1001 = vmatprep.subr.mxu0 %v378
  %1002 = vmatpush1.msra.mxu0 %v377
  %1003 = vmatprep.subr.mxu0 %v376
  %1004 = vmatpush1.msra.mxu0 %v375
  %1005 = vmatprep.subr.mxu0 %v374
  %1006 = vmatpush1.msra.mxu0 %v373
  %1007 = vmatprep.subr.mxu0 %v372
  %1008 = vmatpush1.msra.mxu0 %v371
  %1009 = vmatprep.subr.mxu0 %v370
  %1010 = vmatpush1.msra.mxu0 %v369
  %1011 = vmatprep.subr.mxu0 %v368
  %1012 = vmatpush1.msra.mxu0 %v367
  %1013 = vmatprep.subr.mxu0 %v366
  %1014 = vmatpush1.msra.mxu0 %v365
  %1015 = vmatprep.subr.mxu0 %v364
  %1016 = vmatpush1.msra.mxu0 %v363
  %1017 = vmatprep.subr.mxu0 %v362
  %1018 = vmatpush1.msra.mxu0 %v361
  %1019 = vmatprep.subr.mxu0 %v360
  %1020 = vmatpush1.msra.mxu0 %v359
  %1021 = vmatprep.subr.mxu0 %v358
  %1022 = vmatpush1.msra.mxu0 %v357
  %1023 = vmatprep.subr.mxu0 %v356
  %1024 = vmatpush1.msra.mxu0 %v355
  %1025 = vmatprep.subr.mxu0 0.0
  %1026 = vmatpush2.msra.mxu0 0.0
  %1027 = vmatprep.subr.mxu0 0.0
  %1028 = vmatpush2.msra.mxu0 0.0
  %1029 = vmatprep.subr.mxu0 0.0
  %1030 = vmatpush2.msra.mxu0 0.0
  %1031 = vmatprep.subr.mxu0 0.0
  %1032 = vmatpush2.msra.mxu0 0.0
  %1033 = vmatprep.subr.mxu0 0.0
  %1034 = vmatpush2.msra.mxu0 0.0
  %1035 = vmatprep.subr.mxu0 0.0
  %1036 = vmatpush2.msra.mxu0 0.0
  %1037 = vmatprep.subr.mxu0 0.0
  %1038 = vmatpush2.msra.mxu0 0.0
  %1039 = vmatprep.subr.mxu0 0.0
  %1040 = vmatpush2.msra.mxu0 0.0
  %1041 = vmatprep.subr.mxu0 0.0
  %1042 = vmatpush2.msra.mxu0 0.0
  %1043 = vmatprep.subr.mxu0 0.0
  %1044 = vmatpush2.msra.mxu0 0.0
  %1045 = vmatprep.subr.mxu0 0.0
  %1046 = vmatpush2.msra.mxu0 0.0
  %1047 = vmatprep.subr.mxu0 0.0
  %1048 = vmatpush2.msra.mxu0 0.0
  %1049 = vmatprep.subr.mxu0 0.0
  %1050 = vmatpush2.msra.mxu0 0.0
  %1051 = vmatprep.subr.mxu0 0.0
  %1052 = vmatpush2.msra.mxu0 0.0
  %1053 = vmatprep.subr.mxu0 0.0
  %1054 = vmatpush2.msra.mxu0 0.0
  %1055 = vmatprep.subr.mxu0 0.0
  %1056 = vmatpush2.msra.mxu0 0.0
  %1057 = vmatprep.mubr.f32.mxu0 0.0
  %1058 = vmatmul.mubr.f32.gmra.mxu0 %v986
  %v1059 = vpop.f32.mrf.mxu0
  %v1060 = vadd.f32 0.0, %v1059
  %v1061 = vpop.f32.mrf.mxu0
  %v1062 = vadd.f32 0.0, %v1061
  %1063 = vdwg.mxu0
  %v1064 = vadd.f32 %v991, %v1060
  %v1065 = vadd.f32 %v992, %v1062
  %v1066 = vmul.f32 %v1064, 0.5
  %v1067 = vmul.f32 %v1065, 0.5
  %v1068 = vsel %vm346, %v1064, %v1066
  %v1069 = vsel %vm347, %v1065, %v1067
  %v1070 = vtanh.pop %v1068
  %v1071 = vtanh.pop %v1069
  %v1072 = vmul.f32 %v1070, 0.5
  %v1073 = vmul.f32 %v1071, 0.5
  %v1074 = vadd.f32 %v1072, 0.5
  %v1075 = vadd.f32 %v1073, 0.5
  %v1076 = vsel %vm346, %v1070, %v1074
  %v1077 = vsel %vm347, %v1071, %v1075
  %v1078 = vsel %vm348, %v1077, %v981
  %v1079 = vmul.f32 %v1076, %v1078
  %1080 = vrot.lane.b32.xlu0 %v1079, 64
  %v1081 = vpop.permute.xlu0 %1080
  %v1082 = vadd.f32 %v1079, %v1081
  %1083 = vrot.lane.b32.xlu0 %v1077, 64
  %v1084 = vpop.permute.xlu0 %1083
  %v1085 = vsel %vm348, %v1084, %v1077
  %v1086 = vtanh.pop %v1082
  %v1087 = vmul.f32 %v1085, %v1086
  %v1088 = vld [vmem:[#allocation2 + $0x70] sm:$0xff]
  %v1089 = vld [vmem:[#allocation2 + $0x78] sm:$0xff]
  %v1090 = vld [vmem:[#allocation3] sm:$0xff]
  %v1091 = vld [vmem:[#allocation3 + $0x8] sm:$0xff]
  %v1092 = vadd.f32 %v1088, %v1090
  %v1093 = vadd.f32 %v1089, %v1091
  %1094 = vmatprep.subr.mxu0 %v386
  %1095 = vmatpush1.msra.mxu0 %v385
  %1096 = vmatprep.subr.mxu0 %v384
  %1097 = vmatpush1.msra.mxu0 %v383
  %1098 = vmatprep.subr.mxu0 %v382
  %1099 = vmatpush1.msra.mxu0 %v381
  %1100 = vmatprep.subr.mxu0 %v380
  %1101 = vmatpush1.msra.mxu0 %v379
  %1102 = vmatprep.subr.mxu0 %v378
  %1103 = vmatpush1.msra.mxu0 %v377
  %1104 = vmatprep.subr.mxu0 %v376
  %1105 = vmatpush1.msra.mxu0 %v375
  %1106 = vmatprep.subr.mxu0 %v374
  %1107 = vmatpush1.msra.mxu0 %v373
  %1108 = vmatprep.subr.mxu0 %v372
  %1109 = vmatpush1.msra.mxu0 %v371
  %1110 = vmatprep.subr.mxu0 %v370
  %1111 = vmatpush1.msra.mxu0 %v369
  %1112 = vmatprep.subr.mxu0 %v368
  %1113 = vmatpush1.msra.mxu0 %v367
  %1114 = vmatprep.subr.mxu0 %v366
  %1115 = vmatpush1.msra.mxu0 %v365
  %1116 = vmatprep.subr.mxu0 %v364
  %1117 = vmatpush1.msra.mxu0 %v363
  %1118 = vmatprep.subr.mxu0 %v362
  %1119 = vmatpush1.msra.mxu0 %v361
  %1120 = vmatprep.subr.mxu0 %v360
  %1121 = vmatpush1.msra.mxu0 %v359
  %1122 = vmatprep.subr.mxu0 %v358
  %1123 = vmatpush1.msra.mxu0 %v357
  %1124 = vmatprep.subr.mxu0 %v356
  %1125 = vmatpush1.msra.mxu0 %v355
  %1126 = vmatprep.subr.mxu0 0.0
  %1127 = vmatpush2.msra.mxu0 0.0
  %1128 = vmatprep.subr.mxu0 0.0
  %1129 = vmatpush2.msra.mxu0 0.0
  %1130 = vmatprep.subr.mxu0 0.0
  %1131 = vmatpush2.msra.mxu0 0.0
  %1132 = vmatprep.subr.mxu0 0.0
  %1133 = vmatpush2.msra.mxu0 0.0
  %1134 = vmatprep.subr.mxu0 0.0
  %1135 = vmatpush2.msra.mxu0 0.0
  %1136 = vmatprep.subr.mxu0 0.0
  %1137 = vmatpush2.msra.mxu0 0.0
  %1138 = vmatprep.subr.mxu0 0.0
  %1139 = vmatpush2.msra.mxu0 0.0
  %1140 = vmatprep.subr.mxu0 0.0
  %1141 = vmatpush2.msra.mxu0 0.0
  %1142 = vmatprep.subr.mxu0 0.0
  %1143 = vmatpush2.msra.mxu0 0.0
  %1144 = vmatprep.subr.mxu0 0.0
  %1145 = vmatpush2.msra.mxu0 0.0
  %1146 = vmatprep.subr.mxu0 0.0
  %1147 = vmatpush2.msra.mxu0 0.0
  %1148 = vmatprep.subr.mxu0 0.0
  %1149 = vmatpush2.msra.mxu0 0.0
  %1150 = vmatprep.subr.mxu0 0.0
  %1151 = vmatpush2.msra.mxu0 0.0
  %1152 = vmatprep.subr.mxu0 0.0
  %1153 = vmatpush2.msra.mxu0 0.0
  %1154 = vmatprep.subr.mxu0 0.0
  %1155 = vmatpush2.msra.mxu0 0.0
  %1156 = vmatprep.subr.mxu0 0.0
  %1157 = vmatpush2.msra.mxu0 0.0
  %1158 = vmatprep.mubr.f32.mxu0 0.0
  %1159 = vmatmul.mubr.f32.gmra.mxu0 %v1087
  %v1160 = vpop.f32.mrf.mxu0
  %v1161 = vadd.f32 0.0, %v1160
  %v1162 = vpop.f32.mrf.mxu0
  %v1163 = vadd.f32 0.0, %v1162
  %1164 = vdwg.mxu0
  %v1165 = vadd.f32 %v1092, %v1161
  %v1166 = vadd.f32 %v1093, %v1163
  %v1167 = vmul.f32 %v1165, 0.5
  %v1168 = vmul.f32 %v1166, 0.5
  %v1169 = vsel %vm346, %v1165, %v1167
  %v1170 = vsel %vm347, %v1166, %v1168
  %v1171 = vtanh.pop %v1169
  %v1172 = vtanh.pop %v1170
  %v1173 = vmul.f32 %v1171, 0.5
  %v1174 = vmul.f32 %v1172, 0.5
  %v1175 = vadd.f32 %v1173, 0.5
  %v1176 = vadd.f32 %v1174, 0.5
  %v1177 = vsel %vm346, %v1171, %v1175
  %v1178 = vsel %vm347, %v1172, %v1176
  %v1179 = vsel %vm348, %v1178, %v1082
  %v1180 = vmul.f32 %v1177, %v1179
  %1181 = vrot.lane.b32.xlu0 %v1180, 64
  %v1182 = vpop.permute.xlu0 %1181
  %v1183 = vadd.f32 %v1180, %v1182
  %1184 = vrot.lane.b32.xlu0 %v1178, 64
  %v1185 = vpop.permute.xlu0 %1184
  %v1186 = vsel %vm348, %v1185, %v1178
  %v1187 = vtanh.pop %v1183
  %v1188 = vmul.f32 %v1186, %v1187
  %v1189 = vld [vmem:[%s5] sm:$0x1]
  %v1191 = vlaneseq
  %v1192 = vshrl.u32 %v1191, 7
  %v1193 = vsub.s32 0, %v1192
  %v1194 = vrot.slane %v1189, %v1193
  %v1196 = vmul.f32 %v1188, %v1194
  %1197 = vadd.xlane.f32.xlu0 %v1196
  %v1198 = vpop.xlane.xlu0 %1197
  %v1199 = vld [vmem:[#allocation4] sm:$0x1]
  %v1201 = vlaneseq
  %v1202 = vshrl.u32 %v1201, 7
  %v1203 = vsub.s32 0, %v1202
  %v1204 = vrot.slane %v1199, %v1203
  %v1206 = vadd.f32 %v1198, %v1204
  %v1207 = vxor.u32 %v1206, 2147483648
  %v1208 = vmul.f32 %v1207, 1.442695
  %v1209 = vpow.pop %v1208
  %v1210 = vadd.f32 %v1209, 1.0
  %v1211 = vrcp.pop %v1210
  %v1212 = vmul.f32 1.0, %v1211
  %vm1213 = vcmask 7168
  %1214 = vst.msk [vmem:[%s7] sm:$0xff] %vm1213, %v1212
  // Predicated region
  $region30: #{bilstm_forward.1} parent=0 // pred_check
    _
  $region31: #{bilstm_forward.1} parent=0 // pred_check_branch
    %1216 = sbr.rel (0) target = $region33
  $region32: #{bilstm_forward.1} parent=0 // pred_region
    _
  $region33: #{bilstm_forward.1} parent=0 // pred_fallthru
    _
  // Predicated region
  $region34: #{bilstm_forward.1} parent=0 // pred_check
    _
  $region35: #{bilstm_forward.1} parent=0 // pred_check_branch
    %1218 = sbr.rel (0) target = $region37
  $region36: #{bilstm_forward.1} parent=0 // pred_region
    _
  $region37: #{bilstm_forward.1} parent=0 // pred_fallthru
    _

</llo_original>
